<compile_context>
chip_gen: v5e
topology: v5e:2x2
jax: 0.10.0
libtpu: 0.0.40
codegen_flags: <defaults>
</compile_context>

<pallas_src>
import math

import jax
import jax.numpy as jnp
from jax import lax
from jax.experimental import pallas as pl
from jax.experimental.pallas import tpu as pltpu


# ----------------------------------------------------------------------------
# Structured matrices encoding the "same"-padded convolutions.
# Built ONCE per parameter set (exact: zero padding appears as zero entries).
# ----------------------------------------------------------------------------
def conv1d_toeplitz(w, length):
    """M[i, j] = w[j - i + 3] if valid else 0, so (M @ v) == conv1d(v, w, pad=3)."""
    i = jnp.arange(length)[:, None]
    j = jnp.arange(length)[None, :]
    k = j - i + 3
    valid = (k >= 0) & (k < 7)
    return jnp.where(valid, w[jnp.clip(k, 0, 6)], 0.0).astype(jnp.float32)


def conv2d_flat_toeplitz(w, H, W):
    """T: (2*H*W, H*W) with  concat([maxmap.ravel(), avgmap.ravel()]) @ T ==
    conv2d_same(stack([maxmap, avgmap]), w).ravel()  for a 7x7 kernel, padding 3.
    w: (2, 7, 7) — channel 0 applied to the max map, channel 1 to the mean map
    (matches torch.cat([max_result, avg_result], dim=1))."""
    HW = H * W
    i_src = jnp.arange(H)[:, None, None, None]
    j_src = jnp.arange(W)[None, :, None, None]
    i_out = jnp.arange(H)[None, None, :, None]
    j_out = jnp.arange(W)[None, None, None, :]
    dy = i_src - i_out + 3
    dx = j_src - j_out + 3
    valid = (dy >= 0) & (dy < 7) & (dx >= 0) & (dx < 7)
    dyc = jnp.clip(dy, 0, 6)
    dxc = jnp.clip(dx, 0, 6)
    blocks = [jnp.where(valid, w[s][dyc, dxc], 0.0).reshape(HW, HW) for s in range(2)]
    return jnp.concatenate(blocks, axis=0).astype(jnp.float32)


def build_k_attention_operators(params, C, H, W, spatial_op_dtype=jnp.bfloat16):
    """Build the structured conv operators once per parameter set (hoisted out of the
    per-forward jit path — the O(HW^2) construction is paid only when params change)."""
    m1 = conv1d_toeplitz(params["eca_w"], C)        # (C, C)  — K_Attention.eca
    m2 = conv1d_toeplitz(params["eca2_w"], C)       # (C, C)  — K_Attention.eca_sa.eca
    # Both ECA gates in one matmul:  pooled_c @ [M1^T | M2^T]  ->  (TB, 2C).
    mcat = jnp.concatenate([m1.T, m2.T], axis=1).astype(jnp.float32)       # (C, 2C)
    t1 = conv2d_flat_toeplitz(params["sa_w"], H, W).astype(spatial_op_dtype)   # (2HW, HW)
    t2 = conv2d_flat_toeplitz(params["sa2_w"], H, W).astype(spatial_op_dtype)  # (2HW, HW)
    # ECA gate:  sigmoid(conv(avg) + conv(max)) == sigmoid(M @ (avg + max) + 2*b)
    #  -> fold the factor 2 into the stored bias.
    bias = jnp.stack([2.0 * params["eca_b"], 2.0 * params["eca2_b"],
                      params["sa_b"], params["sa2_b"]]).astype(jnp.float32)    # (4,)
    return {"mcat": mcat, "t1": t1, "t2": t2, "bias": bias}


# ----------------------------------------------------------------------------
# Fused Pallas kernel: one batch TILE (TB elements) per grid step.
# ----------------------------------------------------------------------------
def k_attention_kernel(x_ref, mcat_ref, t1_ref, t2_ref, b_ref, o_ref):
    # x_ref    : (TB, C, H*W) lane-dense activation block
    # mcat_ref : (C, 2C)  f32  merged channel-conv operator [M1^T | M2^T]
    # t1/t2    : (2HW, HW) bf16 flattened spatial-conv operators (sa / eca_sa.sa)
    # b_ref    : (4,) SMEM biases [2*eca_b, 2*eca2_b, sa_b, sa2_b]
    # o_ref    : (TB, C, H*W)
    x = x_ref[...].astype(jnp.float32)
    TB, C, HW = x.shape
    inv_hw = 1.0 / HW
    inv_c = 1.0 / C

    # --- ECA channel gates: shared global pooling, both parameter sets in ONE matmul ---
    pooled_c = jnp.sum(x, axis=2) * inv_hw + jnp.max(x, axis=2)             # (TB, C)
    gc = jnp.dot(pooled_c, mcat_ref[...], preferred_element_type=jnp.float32)  # (TB, 2C)
    g1 = jax.nn.sigmoid(gc[:, :C] + b_ref[0])[:, :, None]                   # (TB, C, 1)
    g2 = jax.nn.sigmoid(gc[:, C:] + b_ref[1])[:, :, None]                   # (TB, C, 1)

    # --- Spatial gate: 7x7 "same" conv on [channel-max ; channel-mean] ---
    op_dtype = t1_ref.dtype

    def spatial_gate(v, t_ref, bias):
        cmax = jnp.max(v, axis=1)                                           # (TB, HW)
        cavg = jnp.sum(v, axis=1) * inv_c                                   # (TB, HW)
        pooled = jnp.concatenate([cmax, cavg], axis=1).astype(op_dtype)     # (TB, 2HW)
        conv = jnp.dot(pooled, t_ref[...],
                       preferred_element_type=jnp.float32) + bias           # (TB, HW)
        return jax.nn.sigmoid(conv)[:, None, :]                             # (TB, 1, HW)

    s1 = spatial_gate(x, t1_ref, b_ref[2])          # sa(x) gate
    e = x * g2                                      # eca_sa.eca(x)
    s2 = spatial_gate(e, t2_ref, b_ref[3])          # eca_sa.sa gate

    # out = eca(x) + sa(x) + sa(eca(x)) = x*(g1 + s1) + e*s2
    o_ref[...] = (x * (g1 + s1) + e * s2).astype(o_ref.dtype)


# ----------------------------------------------------------------------------
# Wrapper
# ----------------------------------------------------------------------------
def _pick_batch_tile(B, max_tb=8):
    """Largest batch tile <= max_tb dividing B that keeps >= 2 grid steps when B >= 2
    (so v7x's two TensorCores both receive work). Never collapses to grid=(1,) for B>1."""
    best = 1
    for tb in range(1, min(B, max_tb) + 1):
        if B % tb == 0 and (B // tb >= 2 or B == 1):
            best = tb
    return best


@jax.jit
def k_attention_fwd(x, ops):
    B, C, H, W = x.shape
    HW = H * W
    x2 = x.reshape(B, C, HW)
    TB = _pick_batch_tile(B)

    # Explicit VMEM budget: double-buffered activation in/out tiles + the constant
    # operators (budgeted at 2x in case single-buffering is not honored) + headroom.
    x_tile_bytes = TB * C * HW * x.dtype.itemsize
    op_bytes = sum(int(ops[k].size) * ops[k].dtype.itemsize
                   for k in ("mcat", "t1", "t2"))
    vmem_limit = int(min(100 * 2**20,
                         max(16 * 2**20, 4 * x_tile_bytes + 2 * op_bytes + 4 * 2**20)))

    def const2d(shape):
        # Grid-invariant operand: fetched once -> single-buffer it (no wasted VMEM).
        return pl.BlockSpec(shape, lambda i: (0, 0), pipeline_mode=pl.Buffered(1))

    out = pl.pallas_call(
        k_attention_kernel,
        out_shape=jax.ShapeDtypeStruct((B, C, HW), x.dtype),
        grid=(B // TB,),
        in_specs=[
            pl.BlockSpec((TB, C, HW), lambda i: (i, 0, 0)),
            const2d((C, 2 * C)),
            const2d((2 * HW, HW)),
            const2d((2 * HW, HW)),
            pl.BlockSpec(memory_space=pltpu.MemorySpace.SMEM),
        ],
        out_specs=pl.BlockSpec((TB, C, HW), lambda i: (i, 0, 0)),
        compiler_params=pltpu.CompilerParams(
            # Batch-tile axis is embarrassingly parallel -> shard across v7x's 2 TCs.
            dimension_semantics=("parallel",),
            vmem_limit_bytes=vmem_limit,
        ),
    )(x2, ops["mcat"], ops["t1"], ops["t2"], ops["bias"])
    return out.reshape(B, C, H, W)


def k_attention(x, params, spatial_op_dtype=jnp.bfloat16):
    """Convenience one-shot entry point (operators rebuilt each call — prefer calling
    build_k_attention_operators once and reusing the result)."""
    B, C, H, W = x.shape
    ops = build_k_attention_operators(params, C, H, W, spatial_op_dtype)
    return k_attention_fwd(x, ops)


# ----------------------------------------------------------------------------
# Pure-JAX reference (numerical verification)
# ----------------------------------------------------------------------------
def eca_ref(x, w, b):
    B, C, H, W = x.shape
    avg = x.mean(axis=(2, 3))                                   # (B, C)
    mx = x.max(axis=(2, 3))

    def conv1d(v):
        vp = jnp.pad(v, ((0, 0), (3, 3)))
        return jnp.stack([jnp.sum(vp[:, i:i + 7] * w, axis=1) for i in range(C)],
                         axis=1) + b

    y = jax.nn.sigmoid(conv1d(avg) + conv1d(mx))                # (B, C)
    return x * y[:, :, None, None]


def sa_ref(x, w, b):
    mx = x.max(axis=1)
    avg = x.mean(axis=1)
    stacked = jnp.stack([mx, avg], axis=1)                      # (B, 2, H, W)
    out = lax.conv_general_dilated(
        stacked, w[None], (1, 1), [(3, 3), (3, 3)],
        dimension_numbers=("NCHW", "OIHW", "NCHW")) + b
    return x * jax.nn.sigmoid(out)


def k_attention_ref(x, p):
    out1 = sa_ref(eca_ref(x, p["eca2_w"], p["eca2_b"]), p["sa2_w"], p["sa2_b"])
    out2 = eca_ref(x, p["eca_w"], p["eca_b"]) + sa_ref(x, p["sa_w"], p["sa_b"])
    return out2 + out1


# ----------------------------------------------------------------------------
if __name__ == "__main__":
    B, C, H, W = 2, 4, 16, 16
    key = jax.random.PRNGKey(0)
    ks = jax.random.split(key, 7)

    x = jax.random.normal(ks[0], (B, C, H, W), dtype=jnp.float32)

    def bf16_round(w):
        # Round spatial-conv weights to bf16 so the f32 reference and the kernel's bf16
        # Toeplitz operator share *identical* weight values (the check then isolates the
        # kernel math; the only residual error is the bf16 cast of the pooled maps).
        return w.astype(jnp.bfloat16).astype(jnp.float32)

    sa_std = (2.0 / 49.0) ** 0.5   # kaiming-normal, fan_out = 1 * 7 * 7
    params = {
        # K_Attention.eca : Conv1d(1, 1, 7, padding=3)
        "eca_w": jax.random.normal(ks[1], (7,), dtype=jnp.float32) * 0.3,
        "eca_b": jax.random.normal(ks[2], (), dtype=jnp.float32) * 0.1,
        # K_Attention.sa : Conv2d(2, 1, 7, padding=3); nonzero bias exercises the bias path
        "sa_w": bf16_round(jax.random.normal(ks[3], (2, 7, 7), dtype=jnp.float32) * sa_std),
        "sa_b": jnp.float32(0.05),
        # K_Attention.eca_sa.eca / .sa (independent parameter sets)
        "eca2_w": jax.random.normal(ks[4], (7,), dtype=jnp.float32) * 0.3,
        "eca2_b": jax.random.normal(ks[5], (), dtype=jnp.float32) * 0.1,
        "sa2_w": bf16_round(jax.random.normal(ks[6], (2, 7, 7), dtype=jnp.float32) * sa_std),
        "sa2_b": jnp.float32(-0.07),
    }

    ops = build_k_attention_operators(params, C, H, W)   # built once per parameter set
    out = jax.block_until_ready(k_attention_fwd(x, ops))
    ref = jax.block_until_ready(k_attention_ref(x, params))

    assert out.shape == x.shape and out.dtype == x.dtype
    # Tolerance reflects the bf16 spatial-operator path (pooled maps fed to the MXU in
    # bf16); conv weights are pre-rounded above so they match the reference exactly.
    if not jnp.allclose(out, ref, atol=2e-2, rtol=2e-2):
        max_err = jnp.max(jnp.abs(out - ref))
        raise AssertionError(f"Pallas kernel output does not match reference (max err {max_err})")
    print("KERNEL_OK")
</pallas_src>

<mosaic_0001>
module attributes {stable_mosaic.version = 11 : i64} {
  func.func @k_attention_kernel(%arg0: i32, %arg1: memref<1x4x256xf32, #tpu.memory_space<vmem>>, %arg2: memref<4x8xf32, #tpu.memory_space<vmem>>, %arg3: memref<512x256xbf16, #tpu.memory_space<vmem>>, %arg4: memref<512x256xbf16, #tpu.memory_space<vmem>>, %arg5: memref<4xf32, #tpu.memory_space<smem>>, %arg6: memref<1x4x256xf32, #tpu.memory_space<vmem>>) attributes {dimension_semantics = [#tpu.dimension_semantics<parallel>], iteration_bounds = array<i64: 2>, scalar_prefetch = 0 : i64, scratch_operands = 0 : i64, tpu.core_type = #tpu.core_type<tc>, window_params = [{transform_indices = @transform_0, window_bounds = array<i64: 1, 4, 256>}, {pipeline_mode = #tpu.pipeline_mode<synchronous>, transform_indices = @transform_1, window_bounds = array<i64: 4, 8>}, {pipeline_mode = #tpu.pipeline_mode<synchronous>, transform_indices = @transform_2, window_bounds = array<i64: 512, 256>}, {pipeline_mode = #tpu.pipeline_mode<synchronous>, transform_indices = @transform_3, window_bounds = array<i64: 512, 256>}, {transform_indices = @transform_4, window_bounds = array<i64: 4>}, {transform_indices = @transform_5, window_bounds = array<i64: 1, 4, 256>}]} {
    %c0 = arith.constant 0 : index
    %c0_0 = arith.constant 0 : index
    %c0_1 = arith.constant 0 : index
    %0 = vector.load %arg1[%c0, %c0_0, %c0_1] : memref<1x4x256xf32, #tpu.memory_space<vmem>>, vector<1x4x256xf32>
    %cst = arith.constant dense<0.000000e+00> : vector<1x4xf32>
    %1 = vector.multi_reduction <add>, %0, %cst [2] : vector<1x4x256xf32> to vector<1x4xf32>
    %cst_2 = arith.constant 3.906250e-03 : f32
    %2 = vector.broadcast %cst_2 : f32 to vector<1x4xf32>
    %3 = arith.mulf %1, %2 : vector<1x4xf32>
    %cst_3 = arith.constant dense<0xFF800000> : vector<1x4xf32>
    %4 = vector.multi_reduction <maximumf>, %0, %cst_3 [2] : vector<1x4x256xf32> to vector<1x4xf32>
    %5 = arith.addf %3, %4 : vector<1x4xf32>
    %c0_4 = arith.constant 0 : index
    %c0_5 = arith.constant 0 : index
    %6 = vector.load %arg2[%c0_4, %c0_5] : memref<4x8xf32, #tpu.memory_space<vmem>>, vector<4x8xf32>
    %cst_6 = arith.constant dense<0.000000e+00> : vector<1x8xf32>
    %7 = tpu.matmul %5, %6, %cst_6 {dimension_numbers = #tpu.dot_dimension_numbers<[1], [0], [0], [1], [0, 0, 1, 1], [], []>} : vector<1x4xf32>, vector<4x8xf32>, vector<1x8xf32> -> vector<1x8xf32>
    %8 = vector.extract_strided_slice %7 {offsets = [0, 0], sizes = [1, 4], strides = [1, 1]} : vector<1x8xf32> to vector<1x4xf32>
    %c0_7 = arith.constant 0 : index
    %9 = memref.load %arg5[%c0_7] : memref<4xf32, #tpu.memory_space<smem>>
    %10 = vector.broadcast %9 : f32 to vector<1x4xf32>
    %11 = arith.addf %8, %10 : vector<1x4xf32>
    %12 = arith.negf %11 : vector<1x4xf32>
    %13 = math.exp %12 : vector<1x4xf32>
    %cst_8 = arith.constant 1.000000e+00 : f32
    %14 = vector.broadcast %cst_8 : f32 to vector<1x4xf32>
    %15 = arith.addf %14, %13 : vector<1x4xf32>
    %16 = arith.divf %14, %15 : vector<1x4xf32>
    %17 = vector.shape_cast %16 : vector<1x4xf32> to vector<1x4x1xf32>
    %18 = vector.extract_strided_slice %7 {offsets = [0, 4], sizes = [1, 4], strides = [1, 1]} : vector<1x8xf32> to vector<1x4xf32>
    %c1 = arith.constant 1 : index
    %19 = memref.load %arg5[%c1] : memref<4xf32, #tpu.memory_space<smem>>
    %20 = vector.broadcast %19 : f32 to vector<1x4xf32>
    %21 = arith.addf %18, %20 : vector<1x4xf32>
    %22 = arith.negf %21 : vector<1x4xf32>
    %23 = math.exp %22 : vector<1x4xf32>
    %cst_9 = arith.constant 1.000000e+00 : f32
    %24 = vector.broadcast %cst_9 : f32 to vector<1x4xf32>
    %25 = arith.addf %24, %23 : vector<1x4xf32>
    %26 = arith.divf %24, %25 : vector<1x4xf32>
    %27 = vector.shape_cast %26 : vector<1x4xf32> to vector<1x4x1xf32>
    %c2 = arith.constant 2 : index
    %28 = memref.load %arg5[%c2] : memref<4xf32, #tpu.memory_space<smem>>
    %cst_10 = arith.constant dense<0xFF800000> : vector<1x256xf32>
    %29 = vector.multi_reduction <maximumf>, %0, %cst_10 [1] : vector<1x4x256xf32> to vector<1x256xf32>
    %cst_11 = arith.constant dense<0.000000e+00> : vector<1x256xf32>
    %30 = vector.multi_reduction <add>, %0, %cst_11 [1] : vector<1x4x256xf32> to vector<1x256xf32>
    %cst_12 = arith.constant 2.500000e-01 : f32
    %31 = vector.broadcast %cst_12 : f32 to vector<1x256xf32>
    %32 = arith.mulf %30, %31 : vector<1x256xf32>
    %33 = tpu.concatenate %29, %32 in 1 : vector<1x256xf32>, vector<1x256xf32> -> vector<1x512xf32>
    %34 = arith.truncf %33 : vector<1x512xf32> to vector<1x512xbf16>
    %c0_13 = arith.constant 0 : index
    %c0_14 = arith.constant 0 : index
    %35 = vector.load %arg3[%c0_13, %c0_14] : memref<512x256xbf16, #tpu.memory_space<vmem>>, vector<512x256xbf16>
    %cst_15 = arith.constant dense<0.000000e+00> : vector<1x256xf32>
    %36 = tpu.matmul %34, %35, %cst_15 {dimension_numbers = #tpu.dot_dimension_numbers<[1], [0], [0], [1], [0, 0, 1, 1], [], []>} : vector<1x512xbf16>, vector<512x256xbf16>, vector<1x256xf32> -> vector<1x256xf32>
    %37 = vector.broadcast %28 : f32 to vector<1x256xf32>
    %38 = arith.addf %36, %37 : vector<1x256xf32>
    %39 = arith.negf %38 : vector<1x256xf32>
    %40 = math.exp %39 : vector<1x256xf32>
    %cst_16 = arith.constant 1.000000e+00 : f32
    %41 = vector.broadcast %cst_16 : f32 to vector<1x256xf32>
    %42 = arith.addf %41, %40 : vector<1x256xf32>
    %43 = arith.divf %41, %42 : vector<1x256xf32>
    %44 = vector.shape_cast %43 : vector<1x256xf32> to vector<1x1x256xf32>
    %45 = vector.broadcast %27 : vector<1x4x1xf32> to vector<1x4x256xf32>
    %46 = arith.mulf %0, %45 : vector<1x4x256xf32>
    %c3 = arith.constant 3 : index
    %47 = memref.load %arg5[%c3] : memref<4xf32, #tpu.memory_space<smem>>
    %cst_17 = arith.constant dense<0xFF800000> : vector<1x256xf32>
    %48 = vector.multi_reduction <maximumf>, %46, %cst_17 [1] : vector<1x4x256xf32> to vector<1x256xf32>
    %cst_18 = arith.constant dense<0.000000e+00> : vector<1x256xf32>
    %49 = vector.multi_reduction <add>, %46, %cst_18 [1] : vector<1x4x256xf32> to vector<1x256xf32>
    %cst_19 = arith.constant 2.500000e-01 : f32
    %50 = vector.broadcast %cst_19 : f32 to vector<1x256xf32>
    %51 = arith.mulf %49, %50 : vector<1x256xf32>
    %52 = tpu.concatenate %48, %51 in 1 : vector<1x256xf32>, vector<1x256xf32> -> vector<1x512xf32>
    %53 = arith.truncf %52 : vector<1x512xf32> to vector<1x512xbf16>
    %c0_20 = arith.constant 0 : index
    %c0_21 = arith.constant 0 : index
    %54 = vector.load %arg4[%c0_20, %c0_21] : memref<512x256xbf16, #tpu.memory_space<vmem>>, vector<512x256xbf16>
    %cst_22 = arith.constant dense<0.000000e+00> : vector<1x256xf32>
    %55 = tpu.matmul %53, %54, %cst_22 {dimension_numbers = #tpu.dot_dimension_numbers<[1], [0], [0], [1], [0, 0, 1, 1], [], []>} : vector<1x512xbf16>, vector<512x256xbf16>, vector<1x256xf32> -> vector<1x256xf32>
    %56 = vector.broadcast %47 : f32 to vector<1x256xf32>
    %57 = arith.addf %55, %56 : vector<1x256xf32>
    %58 = arith.negf %57 : vector<1x256xf32>
    %59 = math.exp %58 : vector<1x256xf32>
    %cst_23 = arith.constant 1.000000e+00 : f32
    %60 = vector.broadcast %cst_23 : f32 to vector<1x256xf32>
    %61 = arith.addf %60, %59 : vector<1x256xf32>
    %62 = arith.divf %60, %61 : vector<1x256xf32>
    %63 = vector.shape_cast %62 : vector<1x256xf32> to vector<1x1x256xf32>
    %64 = vector.broadcast %17 : vector<1x4x1xf32> to vector<1x4x256xf32>
    %65 = vector.broadcast %44 : vector<1x1x256xf32> to vector<1x4x256xf32>
    %66 = arith.addf %64, %65 : vector<1x4x256xf32>
    %67 = arith.mulf %0, %66 : vector<1x4x256xf32>
    %68 = vector.broadcast %63 : vector<1x1x256xf32> to vector<1x4x256xf32>
    %69 = arith.mulf %46, %68 : vector<1x4x256xf32>
    %70 = arith.addf %67, %69 : vector<1x4x256xf32>
    %c0_24 = arith.constant 0 : index
    %c0_25 = arith.constant 0 : index
    %c0_26 = arith.constant 0 : index
    %71 = vector.load %arg6[%c0_24, %c0_25, %c0_26] : memref<1x4x256xf32, #tpu.memory_space<vmem>>, vector<1x4x256xf32>
    tpu.vector_store %arg6[%c0_24, %c0_25, %c0_26], %70 {strides = array<i32>} : memref<1x4x256xf32, #tpu.memory_space<vmem>>, vector<1x4x256xf32>,
    return
  }
  func.func @transform_0(%arg0: i32) -> (i32, i32, i32) {
    %c0_i32 = arith.constant 0 : i32
    %c0_i32_0 = arith.constant 0 : i32
    %c0_i32_1 = arith.constant 0 : i32
    return %arg0, %c0_i32, %c0_i32_0 : i32, i32, i32
  }
  func.func @transform_1(%arg0: i32) -> (i32, i32) {
    %c0_i32 = arith.constant 0 : i32
    %c0_i32_0 = arith.constant 0 : i32
    %c0_i32_1 = arith.constant 0 : i32
    return %c0_i32, %c0_i32_0 : i32, i32
  }
  func.func @transform_2(%arg0: i32) -> (i32, i32) {
    %c0_i32 = arith.constant 0 : i32
    %c0_i32_0 = arith.constant 0 : i32
    %c0_i32_1 = arith.constant 0 : i32
    return %c0_i32, %c0_i32_0 : i32, i32
  }
  func.func @transform_3(%arg0: i32) -> (i32, i32) {
    %c0_i32 = arith.constant 0 : i32
    %c0_i32_0 = arith.constant 0 : i32
    %c0_i32_1 = arith.constant 0 : i32
    return %c0_i32, %c0_i32_0 : i32, i32
  }
  func.func @transform_4(%arg0: i32) -> i32 {
    %c0_i32 = arith.constant 0 : i32
    %c0_i32_0 = arith.constant 0 : i32
    return %c0_i32 : i32
  }
  func.func @transform_5(%arg0: i32) -> (i32, i32, i32) {
    %c0_i32 = arith.constant 0 : i32
    %c0_i32_0 = arith.constant 0 : i32
    %c0_i32_1 = arith.constant 0 : i32
    return %arg0, %c0_i32, %c0_i32_0 : i32, i32, i32
  }
}

</mosaic_0001>

<llo_original>
// kernel: k_attention_fwd.1
$region0: #{k_attention_fwd.1}
  #allocation0 [shape = 'u32[]', space=smem, size = 0x4, offset = 0x4, fixed_abs, tag = 'smem constant byte address 0x4 - core index']
  #allocation1 [shape = 'u32[72,128]{1,0:T(1,128)}', space=vmem, size = 0x9000, scoped, tag = 'internal scratch']
  %s0 = inlined_call_operand.vmem [shape: f32[2,4,256], index: 0, kind: input, shape index: {}]
  %s1 = inlined_call_operand.vmem [shape: f32[4,8], index: 1, kind: input, shape index: {}]
  %s2 = inlined_call_operand.hbm [shape: bf16[512,256], index: 2, kind: input, shape index: {}]
  %s3 = inlined_call_operand.hbm [shape: bf16[512,256], index: 3, kind: input, shape index: {}]
  %s4 = inlined_call_operand.vmem [shape: f32[4], index: 4, kind: input, shape index: {}]
  %s5 = inlined_call_operand.vmem [shape: f32[2,4,256], index: 5, kind: output, shape index: {}]
  %s6 = sld [smem:[#allocation0]]
  $region65: #{k_attention_fwd.1} parent=0
    _
  %s8 = ssub.s32 1, %s6
  %s9 = scalar_select 0, %s8, %s6
  $region1: #{k_attention_fwd.1} parent=0
    #allocation2 [shape = 'u8[262144]{0}', space=vmem, size = 0x40000, scoped, tag = 'input window, operand 2, single buffered']
    #allocation3 [shape = 's32[2]{0}', space=sflag, size = 0x8, scoped, tag = 'scoped memory for k_attention_fwd.1']
    #allocation4 [shape = 's32[2]{0}', space=sflag, size = 0x8, scoped, tag = 'scoped memory for k_attention_fwd.1']
    #allocation5 [shape = 'u8[262144]{0}', space=vmem, size = 0x40000, scoped, tag = 'input window, operand 3, single buffered']
    #allocation6 [shape = 's32[1]{0}', space=sflag, size = 0x4, scoped, tag = 'scoped memory for k_attention_fwd.1']
    #allocation7 [shape = 'u8[512]{0}', space=smem, size = 0x200, scoped, tag = 'input window, operand 4, single buffered']
    %10 = vsyncpa [#allocation3], 0
    %11 = vsyncpa [#allocation6], 0
    %12 = vsyncpa [#allocation4], 0
    loop: start=0, step=1, limit=4
    $region2: #{k_attention_fwd.1} parent=1 // loop_pre_header
      _
    $region3: #{k_attention_fwd.1} parent=1 // loop_header
      %s14 = sphi 0, %s18
      %p15 = scmp.ge.s32.totalorder %s14, 4
      %s24 = sphi 0, %s26
      %s27 = sphi 0, %s24
      %s28 = sphi 0, %s27
      %s44 = sphi 0, %s28
      %s48 = sphi 0, %s48
      %s50 = sphi 0, %s48
      %s51 = sphi 0, %s50
      %s65 = sphi 0, %s51
      %s69 = sphi 0, %s69
      %s71 = sphi 0, %s69
      %s72 = sphi 0, %s71
      %s86 = sphi 0, %s72
      %s90 = sphi 0, %s90
      %s92 = sphi 0, %s90
      %s93 = sphi 0, %s92
      %s107 = sphi 0, %s93
      %s111 = sphi 0, %s111
      %s113 = sphi 0, %s111
      %s114 = sphi 0, %s113
      %s128 = sphi 0, %s114
      %s134 = sphi 0, %s136
      %s137 = sphi 0, %s134
      %s138 = sphi 0, %s137
      %s154 = sphi 0, %s138
    $region4: #{k_attention_fwd.1} parent=1 // loop_header_branch
      %17 = sbr.rel (%p15) target = $region8
    $region5: #{k_attention_fwd.1} parent=1 // loop_body
      %s19 = ssub.s32 %s14, 1
      %s20 = ssub.s32 %s14, 2
      %s21 = sadd.s32 %s14, 1
      %s22 = ssub.s32 %s14, %s21
      %p23 = scmp.eq.s32.totalorder %s22, 0
      %s25 = sadd.s32 %s24, 1
      %s26 = scalar_select %p23, %s24, %s25
      %p29 = pneg %p23
      %p30 = scmp.eq.s32.totalorder %s14, 1
      %p31 = por %p29, %p30
      %p32 = scmp.ne.s32.totalorder %s24, %s27
      %p33 = scmp.eq.s32.totalorder %s14, 0
      %p34 = por %p32, %p33
      %p35 = scmp.ne.s32.totalorder %s24, %s27
      %p36 = scmp.eq.s32.totalorder %s19, 1
      %p37 = por %p35, %p36
      %p38 = scmp.ne.s32.totalorder %s27, %s28
      %p39 = scmp.eq.s32.totalorder %s19, 0
      %p40 = por %p38, %p39
      %p41 = scmp.ne.s32.totalorder %s27, %s28
      %p42 = scmp.eq.s32.totalorder %s20, 1
      %p43 = por %p41, %p42
      %p45 = scmp.ne.s32.totalorder %s28, %s44
      %p46 = scmp.eq.s32.totalorder %s20, 0
      %p47 = por %p45, %p46
      %s49 = sadd.s32 %s48, 1
      %p52 = scmp.eq.s32.totalorder %s14, 1
      %p53 = scmp.ne.s32.totalorder %s48, %s50
      %p54 = scmp.eq.s32.totalorder %s14, 0
      %p55 = por %p53, %p54
      %p56 = scmp.ne.s32.totalorder %s48, %s50
      %p57 = scmp.eq.s32.totalorder %s19, 1
      %p58 = por %p56, %p57
      %p59 = scmp.ne.s32.totalorder %s50, %s51
      %p60 = scmp.eq.s32.totalorder %s19, 0
      %p61 = por %p59, %p60
      %p62 = scmp.ne.s32.totalorder %s50, %s51
      %p63 = scmp.eq.s32.totalorder %s20, 1
      %p64 = por %p62, %p63
      %p66 = scmp.ne.s32.totalorder %s51, %s65
      %p67 = scmp.eq.s32.totalorder %s20, 0
      %p68 = por %p66, %p67
      %s70 = sadd.s32 %s69, 1
      %p73 = scmp.eq.s32.totalorder %s14, 1
      %p74 = scmp.ne.s32.totalorder %s69, %s71
      %p75 = scmp.eq.s32.totalorder %s14, 0
      %p76 = por %p74, %p75
      %p77 = scmp.ne.s32.totalorder %s69, %s71
      %p78 = scmp.eq.s32.totalorder %s19, 1
      %p79 = por %p77, %p78
      %p80 = scmp.ne.s32.totalorder %s71, %s72
      %p81 = scmp.eq.s32.totalorder %s19, 0
      %p82 = por %p80, %p81
      %p83 = scmp.ne.s32.totalorder %s71, %s72
      %p84 = scmp.eq.s32.totalorder %s20, 1
      %p85 = por %p83, %p84
      %p87 = scmp.ne.s32.totalorder %s72, %s86
      %p88 = scmp.eq.s32.totalorder %s20, 0
      %p89 = por %p87, %p88
      %s91 = sadd.s32 %s90, 1
      %p94 = scmp.eq.s32.totalorder %s14, 1
      %p95 = scmp.ne.s32.totalorder %s90, %s92
      %p96 = scmp.eq.s32.totalorder %s14, 0
      %p97 = por %p95, %p96
      %p98 = scmp.ne.s32.totalorder %s90, %s92
      %p99 = scmp.eq.s32.totalorder %s19, 1
      %p100 = por %p98, %p99
      %p101 = scmp.ne.s32.totalorder %s92, %s93
      %p102 = scmp.eq.s32.totalorder %s19, 0
      %p103 = por %p101, %p102
      %p104 = scmp.ne.s32.totalorder %s92, %s93
      %p105 = scmp.eq.s32.totalorder %s20, 1
      %p106 = por %p104, %p105
      %p108 = scmp.ne.s32.totalorder %s93, %s107
      %p109 = scmp.eq.s32.totalorder %s20, 0
      %p110 = por %p108, %p109
      %s112 = sadd.s32 %s111, 1
      %p115 = scmp.eq.s32.totalorder %s14, 1
      %p116 = scmp.ne.s32.totalorder %s111, %s113
      %p117 = scmp.eq.s32.totalorder %s14, 0
      %p118 = por %p116, %p117
      %p119 = scmp.ne.s32.totalorder %s111, %s113
      %p120 = scmp.eq.s32.totalorder %s19, 1
      %p121 = por %p119, %p120
      %p122 = scmp.ne.s32.totalorder %s113, %s114
      %p123 = scmp.eq.s32.totalorder %s19, 0
      %p124 = por %p122, %p123
      %p125 = scmp.ne.s32.totalorder %s113, %s114
      %p126 = scmp.eq.s32.totalorder %s20, 1
      %p127 = por %p125, %p126
      %p129 = scmp.ne.s32.totalorder %s114, %s128
      %p130 = scmp.eq.s32.totalorder %s20, 0
      %p131 = por %p129, %p130
      %s132 = ssub.s32 %s14, %s21
      %p133 = scmp.eq.s32.totalorder %s132, 0
      %s135 = sadd.s32 %s134, 1
      %s136 = scalar_select %p133, %s134, %s135
      %p139 = pneg %p133
      %p140 = scmp.eq.s32.totalorder %s14, 1
      %p141 = por %p139, %p140
      %p142 = scmp.ne.s32.totalorder %s134, %s137
      %p143 = scmp.eq.s32.totalorder %s14, 0
      %p144 = por %p142, %p143
      %p145 = scmp.ne.s32.totalorder %s134, %s137
      %p146 = scmp.eq.s32.totalorder %s19, 1
      %p147 = por %p145, %p146
      %p148 = scmp.ne.s32.totalorder %s137, %s138
      %p149 = scmp.eq.s32.totalorder %s19, 0
      %p150 = por %p148, %p149
      %p151 = scmp.ne.s32.totalorder %s137, %s138
      %p152 = scmp.eq.s32.totalorder %s20, 1
      %p153 = por %p151, %p152
      %p155 = scmp.ne.s32.totalorder %s138, %s154
      %p156 = scmp.eq.s32.totalorder %s20, 0
      %p157 = por %p155, %p156
      %p158 = scmp.le.s32.totalorder 1, %s14
      %p159 = scmp.lt.s32.totalorder %s14, 3
      %p160 = pnand %p158, %p159
      %p161 = pneg %p160
      // Predicated region
      $region9: #{k_attention_fwd.1} parent=5 // pred_check
        _
      $region10: #{k_attention_fwd.1} parent=5 // pred_check_branch
        %163 = sbr.rel (%p160) target = $region12
      $region11: #{k_attention_fwd.1} parent=5 // pred_region
        %s164 = ssub.s32 %s14, 1
        // Predicated region
        $region13: #{k_attention_fwd.1} parent=11 // pred_check
          %p165 = pneg %p61
        $region14: #{k_attention_fwd.1} parent=11 // pred_check_branch
          %167 = sbr.rel (%p165) target = $region16
        $region15: #{k_attention_fwd.1} parent=11 // pred_region
          _
        $region16: #{k_attention_fwd.1} parent=11 // pred_fallthru
          _
        // Predicated region
        $region17: #{k_attention_fwd.1} parent=11 // pred_check
          %p168 = pneg %p82
        $region18: #{k_attention_fwd.1} parent=11 // pred_check_branch
          %170 = sbr.rel (%p168) target = $region20
        $region19: #{k_attention_fwd.1} parent=11 // pred_region
          %172 = vsyncadd [#allocation3], 0
          %s173 = sshll.u32 %s2, 4
          %s174 = int_to_ptr.hbm [resolvable:$true] %s173
          %s175 = sshll.u32 [#allocation2], 4
          %s176 = int_to_ptr.vmem [resolvable:$true] %s175
          %181 = dma.hbm_to_vmem [thread:$0]  %s174, 8192, %s176, [#allocation3], 128, 128, 8
        $region20: #{k_attention_fwd.1} parent=11 // pred_fallthru
          _
        // Predicated region
        $region21: #{k_attention_fwd.1} parent=11 // pred_check
          %p182 = pneg %p103
        $region22: #{k_attention_fwd.1} parent=11 // pred_check_branch
          %184 = sbr.rel (%p182) target = $region24
        $region23: #{k_attention_fwd.1} parent=11 // pred_region
          %186 = vsyncadd [#allocation6], 0
          %s187 = sshll.u32 %s3, 4
          %s188 = int_to_ptr.hbm [resolvable:$true] %s187
          %s189 = sshll.u32 [#allocation5], 4
          %s190 = int_to_ptr.vmem [resolvable:$true] %s189
          %195 = dma.hbm_to_vmem [thread:$0]  %s188, 8192, %s190, [#allocation6], 128, 128, 8
        $region24: #{k_attention_fwd.1} parent=11 // pred_fallthru
          _
        // Predicated region
        $region25: #{k_attention_fwd.1} parent=11 // pred_check
          %p196 = pneg %p124
        $region26: #{k_attention_fwd.1} parent=11 // pred_check_branch
          %198 = sbr.rel (%p196) target = $region28
        $region27: #{k_attention_fwd.1} parent=11 // pred_region
          %200 = vsyncadd [#allocation4], 0
          %s202 = sshll.u32 %s4, 4
          %s203 = int_to_ptr.vmem [resolvable:$true] %s202
          %205 = dma.vmem_to_smem %s203, 16, [#allocation7], [#allocation4]
        $region28: #{k_attention_fwd.1} parent=11 // pred_fallthru
          _
      $region12: #{k_attention_fwd.1} parent=5 // pred_fallthru
        _
      %p206 = scmp.lt.s32.totalorder %s14, 2
      // Predicated region
      $region29: #{k_attention_fwd.1} parent=5 // pred_check
        %p207 = pneg %p206
      $region30: #{k_attention_fwd.1} parent=5 // pred_check_branch
        %209 = sbr.rel (%p207) target = $region32
      $region31: #{k_attention_fwd.1} parent=5 // pred_region
        // Predicated region
        $region33: #{k_attention_fwd.1} parent=31 // pred_check
          %p210 = pneg %p34
        $region34: #{k_attention_fwd.1} parent=31 // pred_check_branch
          %212 = sbr.rel (%p210) target = $region36
        $region35: #{k_attention_fwd.1} parent=31 // pred_region
          %p213 = scmp.lt.s32.totalorder %s14, 1
          %s214 = scalar_select %p213, %s14, 1
          %s215 = smul.addr %s214, 2
          %s216 = smul.addr %s215, 4
          %s217 = scalar_lea.vmem %s0, %s216
        $region36: #{k_attention_fwd.1} parent=31 // pred_fallthru
          _
      $region32: #{k_attention_fwd.1} parent=5 // pred_fallthru
        _
      %p218 = scmp.le.s32.totalorder 1, %s14
      %p219 = scmp.lt.s32.totalorder %s14, 3
      %p220 = pnand %p218, %p219
      %p221 = pneg %p220
      // Predicated region
      $region37: #{k_attention_fwd.1} parent=5 // pred_check
        _
      $region38: #{k_attention_fwd.1} parent=5 // pred_check_branch
        %223 = sbr.rel (%p220) target = $region40
      $region39: #{k_attention_fwd.1} parent=5 // pred_region
        %s224 = ssub.s32 %s14, 1
        // Predicated region
        $region41: #{k_attention_fwd.1} parent=39 // pred_check
          %p225 = pneg %p82
        $region42: #{k_attention_fwd.1} parent=39 // pred_check_branch
          %227 = sbr.rel (%p225) target = $region44
        $region43: #{k_attention_fwd.1} parent=39 // pred_region
          %229 = dma.done [#allocation3], 8192
        $region44: #{k_attention_fwd.1} parent=39 // pred_fallthru
          _
        // Predicated region
        $region45: #{k_attention_fwd.1} parent=39 // pred_check
          %p230 = pneg %p103
        $region46: #{k_attention_fwd.1} parent=39 // pred_check_branch
          %232 = sbr.rel (%p230) target = $region48
        $region47: #{k_attention_fwd.1} parent=39 // pred_region
          %234 = dma.done [#allocation6], 8192
        $region48: #{k_attention_fwd.1} parent=39 // pred_fallthru
          _
        // Predicated region
        $region49: #{k_attention_fwd.1} parent=39 // pred_check
          %p235 = pneg %p124
        $region50: #{k_attention_fwd.1} parent=39 // pred_check_branch
          %237 = sbr.rel (%p235) target = $region52
        $region51: #{k_attention_fwd.1} parent=39 // pred_region
          %239 = dma.done [#allocation4], 16
        $region52: #{k_attention_fwd.1} parent=39 // pred_fallthru
          _
        %240 = sfence
        %p241 = scmp.lt.s32.totalorder %s19, 1
        %s242 = scalar_select %p241, %s19, 1
        %s243 = smul.addr %s242, 2
        %s244 = smul.addr %s243, 4
        %s245 = scalar_lea.vmem %s0, %s244
        %p246 = pneg %p40
        %p247 = pneg %p37
        %p248 = pneg %p61
        %p249 = pneg %p58
        %p250 = pneg %p82
        %p251 = pneg %p79
        %p252 = pneg %p103
        %p253 = pneg %p100
        %p254 = pneg %p124
        %p255 = pneg %p121
        %p256 = pneg %p150
        %p257 = pneg %p147
        %p258 = scmp.lt.s32.totalorder %s19, 1
        %s259 = scalar_select %p258, %s19, 1
        %s260 = smul.addr %s259, 2
        %s261 = smul.addr %s260, 4
        %s262 = scalar_lea.vmem %s5, %s261
        %p263 = scmp.lt.s32.totalorder %s19, 1
        %s264 = scalar_select %p263, %s19, 1
        %s265 = smul.addr %s264, 2
        %s266 = smul.addr %s265, 4
        %s267 = scalar_lea.vmem %s0, %s266
        %p268 = scmp.lt.s32.totalorder %s19, 1
        %s269 = scalar_select %p268, %s19, 1
        %s270 = smul.addr %s269, 2
        %s271 = smul.addr %s270, 4
        %s272 = scalar_lea.vmem %s5, %s271
        %v273 = vld [vmem:[%s267] sm:$0xff]
        %275 = vst [vmem:[#allocation1] ss:$2 sm:$0xff] %v273
        %v276 = vld.sshfl [vmem:[#allocation1] sm:$0xff pattern:$0x75316420]
        %v277 = vld.sshfl [vmem:[#allocation1 + $0x8] sm:$0xff pattern:$0x75316420]
        %vm280 = vcmask 1043456
        %v281 = vsel %vm280, %v276, 0.0
        %v282 = vsel %vm280, %v277, 0.0
        %v283 = vadd.f32 %v281, %v282
        %284 = vadd.xlane.f32.xlu0 %v283
        %v285 = vpop.xlane.xlu0 %284
        %v286 = vmul.f32 %v285, 0.00390625
        %287 = vst [vmem:[#allocation1] ss:$2 sm:$0xff] %v273
        %v288 = vld.sshfl [vmem:[#allocation1] sm:$0xff pattern:$0x75316420]
        %v289 = vld.sshfl [vmem:[#allocation1 + $0x8] sm:$0xff pattern:$0x75316420]
        %v292 = vsel %vm280, %v288, -inf
        %v293 = vsel %vm280, %v289, -inf
        %v294 = vmax.f32 %v292, %v293
        %295 = vmax.xlane.f32.xlu0 %v294
        %v296 = vpop.xlane.xlu0 %295
        %v297 = vadd.f32 %v286, %v296
        %v298 = vld [vmem:[%s1] sm:$0xf]
        %v300 = vlaneseq
        %v301 = vand.u32 %v300, 127
        %v302 = vperm.slane %v297, %v301
        %vm303 = vcmask 31744
        %v304 = vsel %vm303, %v302, 0
        %v307 = vsel %vm280, %v298, 0
        %309 = vmatpush.msra.mxu0 0.0
        %310 = vmatpush.msra.mxu0 0.0
        %311 = vmatpush.msra.mxu0 0.0
        %312 = vmatpush.msra.mxu0 0.0
        %313 = vmatpush.msra.mxu0 0.0
        %314 = vmatpush.msra.mxu0 0.0
        %315 = vmatpush.msra.mxu0 0.0
        %316 = vmatpush.msra.mxu0 0.0
        %317 = vmatpush.msra.mxu0 0.0
        %318 = vmatpush.msra.mxu0 0.0
        %319 = vmatpush.msra.mxu0 0.0
        %320 = vmatpush.msra.mxu0 0.0
        %321 = vmatpush.msra.mxu0 0.0
        %322 = vmatpush.msra.mxu0 0.0
        %323 = vmatpush.msra.mxu0 0.0
        %324 = vmatpush.msra.mxu0 %v307
        %325 = vmatmul.f32.gmra.mxu0 %v304
        %v326 = vpop.f32.mrf.mxu0
        %v327 = vadd.f32 0.0, %v326
        %328 = vdwg.mxu0
        %s329 = sld [smem:[#allocation7]]
        %v330 = vstv %s329
        %v331 = vadd.f32 %v327, %v330
        %v332 = vxor.u32 %v331, 2147483648
        %v333 = vmul.f32 %v332, 1.442695
        %v334 = vpow.pop %v333
        %v335 = vadd.f32 %v334, 1.0
        %v336 = vrcp.pop %v335
        %v337 = vmul.f32 %v335, %v336
        %v338 = vsub.f32 1.0, %v337
        %v339 = vmul.f32 %v336, %v338
        %v340 = vadd.f32 %v336, %v339
        %vm341 = vweird.f32 %v335
        %vm342 = vweird.f32 %v336
        %vm343 = vmor %vm341, %vm342
        %v344 = vsel %vm343, %v336, %v340
        %v345 = vand.u32 2147483647, %v335
        %vm346 = vcmp.eq.f32.partialorder %v345, 8.507059e+37
        %v347 = vand.u32 %v335, 2147483648
        %v348 = vor.u32 1.1754944e-38, %v347
        %v349 = vsel %vm346, %v348, %v344
        %v350 = vmul.f32 1.0, %v349
        %v351 = vperm.slane %v350, 0
        %v352 = vlaneseq
        %v353 = vshrl.u32 %v352, 7
        %355 = vset.pattern.permute.xlu0 %v353
        %356 = vperm.xlu0 %355, %v351
        %v357 = vpop.permute.xlu0 %356
        %s358 = sld [smem:[#allocation7 + $0x1]]
        %v359 = vstv %s358
        %v360 = vadd.f32 %v327, %v359
        %v361 = vxor.u32 %v360, 2147483648
        %v362 = vmul.f32 %v361, 1.442695
        %v363 = vpow.pop %v362
        %v364 = vadd.f32 %v363, 1.0
        %v365 = vrcp.pop %v364
        %v366 = vmul.f32 %v364, %v365
        %v367 = vsub.f32 1.0, %v366
        %v368 = vmul.f32 %v365, %v367
        %v369 = vadd.f32 %v365, %v368
        %vm370 = vweird.f32 %v364
        %vm371 = vweird.f32 %v365
        %vm372 = vmor %vm370, %vm371
        %v373 = vsel %vm372, %v365, %v369
        %v374 = vand.u32 2147483647, %v364
        %vm375 = vcmp.eq.f32.partialorder %v374, 8.507059e+37
        %v376 = vand.u32 %v364, 2147483648
        %v377 = vor.u32 1.1754944e-38, %v376
        %v378 = vsel %vm375, %v377, %v373
        %v379 = vmul.f32 1.0, %v378
        %v380 = vperm.slane %v379, 0
        %v381 = vlaneseq
        %v382 = vshrl.u32 %v381, 7
        %v383 = vadd.s32 %v382, 4
        %384 = vset.pattern.permute.xlu0 %v383
        %385 = vperm.xlu0 %384, %v380
        %v386 = vpop.permute.xlu0 %385
        %s387 = sld [smem:[#allocation7 + $0x2]]
        %388 = vst [vmem:[#allocation1] ss:$2 sm:$0xff] %v273
        %v389 = vld.sshfl [vmem:[#allocation1] sm:$0xff pattern:$0x75316420]
        %v390 = vld.sshfl [vmem:[#allocation1 + $0x8] sm:$0xff pattern:$0x75316420]
        %v393 = vsel %vm280, %v389, -inf
        %v394 = vrot.slane %v393, 4
        %v395 = vmax.f32 %v393, %v394
        %v396 = vrot.slane %v395, 2
        %v397 = vmax.f32 %v395, %v396
        %v398 = vrot.slane %v397, 1
        %v399 = vmax.f32 %v397, %v398
        %v400 = vsel %vm280, %v390, -inf
        %v401 = vrot.slane %v400, 4
        %v402 = vmax.f32 %v400, %v401
        %v403 = vrot.slane %v402, 2
        %v404 = vmax.f32 %v402, %v403
        %v405 = vrot.slane %v404, 1
        %v406 = vmax.f32 %v404, %v405
        %407 = vst [vmem:[#allocation1] ss:$2 sm:$0xff] %v273
        %v408 = vld.sshfl [vmem:[#allocation1] sm:$0xff pattern:$0x75316420]
        %v409 = vld.sshfl [vmem:[#allocation1 + $0x8] sm:$0xff pattern:$0x75316420]
        %v412 = vsel %vm280, %v408, 0.0
        %v413 = vrot.slane %v412, 4
        %v414 = vadd.f32 %v412, %v413
        %v415 = vrot.slane %v414, 2
        %v416 = vadd.f32 %v414, %v415
        %v417 = vrot.slane %v416, 1
        %v418 = vadd.f32 %v416, %v417
        %v419 = vsel %vm280, %v409, 0.0
        %v420 = vrot.slane %v419, 4
        %v421 = vadd.f32 %v419, %v420
        %v422 = vrot.slane %v421, 2
        %v423 = vadd.f32 %v421, %v422
        %v424 = vrot.slane %v423, 1
        %v425 = vadd.f32 %v423, %v424
        %v426 = vmul.f32 %v418, 0.25
        %v427 = vmul.f32 %v425, 0.25
        %v428 = vpack.c.bf16 %v399, %v399
        %v429 = vpack.c.bf16 %v406, %v406
        %v430 = vpack.c.bf16 %v426, %v426
        %v431 = vpack.c.bf16 %v427, %v427
        %v432 = vld [vmem:[#allocation2] sm:$0xff]
        %v433 = vld [vmem:[#allocation2 + $0x8] sm:$0xff]
        %v434 = vld [vmem:[#allocation2 + $0x10] sm:$0xff]
        %v435 = vld [vmem:[#allocation2 + $0x18] sm:$0xff]
        %v436 = vld [vmem:[#allocation2 + $0x20] sm:$0xff]
        %v437 = vld [vmem:[#allocation2 + $0x28] sm:$0xff]
        %v438 = vld [vmem:[#allocation2 + $0x30] sm:$0xff]
        %v439 = vld [vmem:[#allocation2 + $0x38] sm:$0xff]
        %v440 = vld [vmem:[#allocation2 + $0x40] sm:$0xff]
        %v441 = vld [vmem:[#allocation2 + $0x48] sm:$0xff]
        %v442 = vld [vmem:[#allocation2 + $0x50] sm:$0xff]
        %v443 = vld [vmem:[#allocation2 + $0x58] sm:$0xff]
        %v444 = vld [vmem:[#allocation2 + $0x60] sm:$0xff]
        %v445 = vld [vmem:[#allocation2 + $0x68] sm:$0xff]
        %v446 = vld [vmem:[#allocation2 + $0x70] sm:$0xff]
        %v447 = vld [vmem:[#allocation2 + $0x78] sm:$0xff]
        %v448 = vld [vmem:[#allocation2 + $0x80] sm:$0xff]
        %v449 = vld [vmem:[#allocation2 + $0x88] sm:$0xff]
        %v450 = vld [vmem:[#allocation2 + $0x90] sm:$0xff]
        %v451 = vld [vmem:[#allocation2 + $0x98] sm:$0xff]
        %v452 = vld [vmem:[#allocation2 + $0xa0] sm:$0xff]
        %v453 = vld [vmem:[#allocation2 + $0xa8] sm:$0xff]
        %v454 = vld [vmem:[#allocation2 + $0xb0] sm:$0xff]
        %v455 = vld [vmem:[#allocation2 + $0xb8] sm:$0xff]
        %v456 = vld [vmem:[#allocation2 + $0xc0] sm:$0xff]
        %v457 = vld [vmem:[#allocation2 + $0xc8] sm:$0xff]
        %v458 = vld [vmem:[#allocation2 + $0xd0] sm:$0xff]
        %v459 = vld [vmem:[#allocation2 + $0xd8] sm:$0xff]
        %v460 = vld [vmem:[#allocation2 + $0xe0] sm:$0xff]
        %v461 = vld [vmem:[#allocation2 + $0xe8] sm:$0xff]
        %v462 = vld [vmem:[#allocation2 + $0xf0] sm:$0xff]
        %v463 = vld [vmem:[#allocation2 + $0xf8] sm:$0xff]
        %v464 = vld [vmem:[#allocation2 + $0x100] sm:$0xff]
        %v465 = vld [vmem:[#allocation2 + $0x108] sm:$0xff]
        %v466 = vld [vmem:[#allocation2 + $0x110] sm:$0xff]
        %v467 = vld [vmem:[#allocation2 + $0x118] sm:$0xff]
        %v468 = vld [vmem:[#allocation2 + $0x120] sm:$0xff]
        %v469 = vld [vmem:[#allocation2 + $0x128] sm:$0xff]
        %v470 = vld [vmem:[#allocation2 + $0x130] sm:$0xff]
        %v471 = vld [vmem:[#allocation2 + $0x138] sm:$0xff]
        %v472 = vld [vmem:[#allocation2 + $0x140] sm:$0xff]
        %v473 = vld [vmem:[#allocation2 + $0x148] sm:$0xff]
        %v474 = vld [vmem:[#allocation2 + $0x150] sm:$0xff]
        %v475 = vld [vmem:[#allocation2 + $0x158] sm:$0xff]
        %v476 = vld [vmem:[#allocation2 + $0x160] sm:$0xff]
        %v477 = vld [vmem:[#allocation2 + $0x168] sm:$0xff]
        %v478 = vld [vmem:[#allocation2 + $0x170] sm:$0xff]
        %v479 = vld [vmem:[#allocation2 + $0x178] sm:$0xff]
        %v480 = vld [vmem:[#allocation2 + $0x180] sm:$0xff]
        %v481 = vld [vmem:[#allocation2 + $0x188] sm:$0xff]
        %v482 = vld [vmem:[#allocation2 + $0x190] sm:$0xff]
        %v483 = vld [vmem:[#allocation2 + $0x198] sm:$0xff]
        %v484 = vld [vmem:[#allocation2 + $0x1a0] sm:$0xff]
        %v485 = vld [vmem:[#allocation2 + $0x1a8] sm:$0xff]
        %v486 = vld [vmem:[#allocation2 + $0x1b0] sm:$0xff]
        %v487 = vld [vmem:[#allocation2 + $0x1b8] sm:$0xff]
        %v488 = vld [vmem:[#allocation2 + $0x1c0] sm:$0xff]
        %v489 = vld [vmem:[#allocation2 + $0x1c8] sm:$0xff]
        %v490 = vld [vmem:[#allocation2 + $0x1d0] sm:$0xff]
        %v491 = vld [vmem:[#allocation2 + $0x1d8] sm:$0xff]
        %v492 = vld [vmem:[#allocation2 + $0x1e0] sm:$0xff]
        %v493 = vld [vmem:[#allocation2 + $0x1e8] sm:$0xff]
        %v494 = vld [vmem:[#allocation2 + $0x1f0] sm:$0xff]
        %v495 = vld [vmem:[#allocation2 + $0x1f8] sm:$0xff]
        %v496 = vstv %s387
        %v561 = vunpack.c.l.b16 %v432
        %v562 = vunpack.c.h.b16 %v432
        %v563 = vunpack.c.l.b16 %v433
        %v564 = vunpack.c.h.b16 %v433
        %v565 = vunpack.c.l.b16 %v434
        %v566 = vunpack.c.h.b16 %v434
        %v567 = vunpack.c.l.b16 %v435
        %v568 = vunpack.c.h.b16 %v435
        %v569 = vunpack.c.l.b16 %v436
        %v570 = vunpack.c.h.b16 %v436
        %v571 = vunpack.c.l.b16 %v437
        %v572 = vunpack.c.h.b16 %v437
        %v573 = vunpack.c.l.b16 %v438
        %v574 = vunpack.c.h.b16 %v438
        %v575 = vunpack.c.l.b16 %v439
        %v576 = vunpack.c.h.b16 %v439
        %v577 = vunpack.c.l.b16 %v440
        %v578 = vunpack.c.h.b16 %v440
        %v579 = vunpack.c.l.b16 %v441
        %v580 = vunpack.c.h.b16 %v441
        %v581 = vunpack.c.l.b16 %v442
        %v582 = vunpack.c.h.b16 %v442
        %v583 = vunpack.c.l.b16 %v443
        %v584 = vunpack.c.h.b16 %v443
        %v585 = vunpack.c.l.b16 %v444
        %v586 = vunpack.c.h.b16 %v444
        %v587 = vunpack.c.l.b16 %v445
        %v588 = vunpack.c.h.b16 %v445
        %v589 = vunpack.c.l.b16 %v446
        %v590 = vunpack.c.h.b16 %v446
        %v591 = vunpack.c.l.b16 %v447
        %v592 = vunpack.c.h.b16 %v447
        %v593 = vunpack.c.l.b16 %v448
        %v594 = vunpack.c.h.b16 %v448
        %v595 = vunpack.c.l.b16 %v449
        %v596 = vunpack.c.h.b16 %v449
        %v597 = vunpack.c.l.b16 %v450
        %v598 = vunpack.c.h.b16 %v450
        %v599 = vunpack.c.l.b16 %v451
        %v600 = vunpack.c.h.b16 %v451
        %v601 = vunpack.c.l.b16 %v452
        %v602 = vunpack.c.h.b16 %v452
        %v603 = vunpack.c.l.b16 %v453
        %v604 = vunpack.c.h.b16 %v453
        %v605 = vunpack.c.l.b16 %v454
        %v606 = vunpack.c.h.b16 %v454
        %v607 = vunpack.c.l.b16 %v455
        %v608 = vunpack.c.h.b16 %v455
        %v609 = vunpack.c.l.b16 %v456
        %v610 = vunpack.c.h.b16 %v456
        %v611 = vunpack.c.l.b16 %v457
        %v612 = vunpack.c.h.b16 %v457
        %v613 = vunpack.c.l.b16 %v458
        %v614 = vunpack.c.h.b16 %v458
        %v615 = vunpack.c.l.b16 %v459
        %v616 = vunpack.c.h.b16 %v459
        %v617 = vunpack.c.l.b16 %v460
        %v618 = vunpack.c.h.b16 %v460
        %v619 = vunpack.c.l.b16 %v461
        %v620 = vunpack.c.h.b16 %v461
        %v621 = vunpack.c.l.b16 %v462
        %v622 = vunpack.c.h.b16 %v462
        %v623 = vunpack.c.l.b16 %v463
        %v624 = vunpack.c.h.b16 %v463
        %v625 = vunpack.c.l.b16 %v464
        %v626 = vunpack.c.h.b16 %v464
        %v627 = vunpack.c.l.b16 %v465
        %v628 = vunpack.c.h.b16 %v465
        %v629 = vunpack.c.l.b16 %v466
        %v630 = vunpack.c.h.b16 %v466
        %v631 = vunpack.c.l.b16 %v467
        %v632 = vunpack.c.h.b16 %v467
        %v633 = vunpack.c.l.b16 %v468
        %v634 = vunpack.c.h.b16 %v468
        %v635 = vunpack.c.l.b16 %v469
        %v636 = vunpack.c.h.b16 %v469
        %v637 = vunpack.c.l.b16 %v470
        %v638 = vunpack.c.h.b16 %v470
        %v639 = vunpack.c.l.b16 %v471
        %v640 = vunpack.c.h.b16 %v471
        %v641 = vunpack.c.l.b16 %v472
        %v642 = vunpack.c.h.b16 %v472
        %v643 = vunpack.c.l.b16 %v473
        %v644 = vunpack.c.h.b16 %v473
        %v645 = vunpack.c.l.b16 %v474
        %v646 = vunpack.c.h.b16 %v474
        %v647 = vunpack.c.l.b16 %v475
        %v648 = vunpack.c.h.b16 %v475
        %v649 = vunpack.c.l.b16 %v476
        %v650 = vunpack.c.h.b16 %v476
        %v651 = vunpack.c.l.b16 %v477
        %v652 = vunpack.c.h.b16 %v477
        %v653 = vunpack.c.l.b16 %v478
        %v654 = vunpack.c.h.b16 %v478
        %v655 = vunpack.c.l.b16 %v479
        %v656 = vunpack.c.h.b16 %v479
        %v657 = vunpack.c.l.b16 %v480
        %v658 = vunpack.c.h.b16 %v480
        %v659 = vunpack.c.l.b16 %v481
        %v660 = vunpack.c.h.b16 %v481
        %v661 = vunpack.c.l.b16 %v482
        %v662 = vunpack.c.h.b16 %v482
        %v663 = vunpack.c.l.b16 %v483
        %v664 = vunpack.c.h.b16 %v483
        %v665 = vunpack.c.l.b16 %v484
        %v666 = vunpack.c.h.b16 %v484
        %v667 = vunpack.c.l.b16 %v485
        %v668 = vunpack.c.h.b16 %v485
        %v669 = vunpack.c.l.b16 %v486
        %v670 = vunpack.c.h.b16 %v486
        %v671 = vunpack.c.l.b16 %v487
        %v672 = vunpack.c.h.b16 %v487
        %v673 = vunpack.c.l.b16 %v488
        %v674 = vunpack.c.h.b16 %v488
        %v675 = vunpack.c.l.b16 %v489
        %v676 = vunpack.c.h.b16 %v489
        %v677 = vunpack.c.l.b16 %v490
        %v678 = vunpack.c.h.b16 %v490
        %v679 = vunpack.c.l.b16 %v491
        %v680 = vunpack.c.h.b16 %v491
        %v681 = vunpack.c.l.b16 %v492
        %v682 = vunpack.c.h.b16 %v492
        %v683 = vunpack.c.l.b16 %v493
        %v684 = vunpack.c.h.b16 %v493
        %v685 = vunpack.c.l.b16 %v494
        %v686 = vunpack.c.h.b16 %v494
        %v687 = vunpack.c.l.b16 %v495
        %v688 = vunpack.c.h.b16 %v495
        %v689 = vpack.c.b16 %v563, %v561
        %v690 = vpack.c.b16 %v564, %v562
        %v691 = vpack.c.b16 %v567, %v565
        %v692 = vpack.c.b16 %v568, %v566
        %v693 = vpack.c.b16 %v571, %v569
        %v694 = vpack.c.b16 %v572, %v570
        %v695 = vpack.c.b16 %v575, %v573
        %v696 = vpack.c.b16 %v576, %v574
        %v697 = vpack.c.b16 %v579, %v577
        %v698 = vpack.c.b16 %v580, %v578
        %v699 = vpack.c.b16 %v583, %v581
        %v700 = vpack.c.b16 %v584, %v582
        %v701 = vpack.c.b16 %v587, %v585
        %v702 = vpack.c.b16 %v588, %v586
        %v703 = vpack.c.b16 %v591, %v589
        %v704 = vpack.c.b16 %v592, %v590
        %v705 = vpack.c.b16 %v595, %v593
        %v706 = vpack.c.b16 %v596, %v594
        %v707 = vpack.c.b16 %v599, %v597
        %v708 = vpack.c.b16 %v600, %v598
        %v709 = vpack.c.b16 %v603, %v601
        %v710 = vpack.c.b16 %v604, %v602
        %v711 = vpack.c.b16 %v607, %v605
        %v712 = vpack.c.b16 %v608, %v606
        %v713 = vpack.c.b16 %v611, %v609
        %v714 = vpack.c.b16 %v612, %v610
        %v715 = vpack.c.b16 %v615, %v613
        %v716 = vpack.c.b16 %v616, %v614
        %v717 = vpack.c.b16 %v619, %v617
        %v718 = vpack.c.b16 %v620, %v618
        %v719 = vpack.c.b16 %v623, %v621
        %v720 = vpack.c.b16 %v624, %v622
        %v721 = vpack.c.b16 %v627, %v625
        %v722 = vpack.c.b16 %v628, %v626
        %v723 = vpack.c.b16 %v631, %v629
        %v724 = vpack.c.b16 %v632, %v630
        %v725 = vpack.c.b16 %v635, %v633
        %v726 = vpack.c.b16 %v636, %v634
        %v727 = vpack.c.b16 %v639, %v637
        %v728 = vpack.c.b16 %v640, %v638
        %v729 = vpack.c.b16 %v643, %v641
        %v730 = vpack.c.b16 %v644, %v642
        %v731 = vpack.c.b16 %v647, %v645
        %v732 = vpack.c.b16 %v648, %v646
        %v733 = vpack.c.b16 %v651, %v649
        %v734 = vpack.c.b16 %v652, %v650
        %v735 = vpack.c.b16 %v655, %v653
        %v736 = vpack.c.b16 %v656, %v654
        %v737 = vpack.c.b16 %v659, %v657
        %v738 = vpack.c.b16 %v660, %v658
        %v739 = vpack.c.b16 %v663, %v661
        %v740 = vpack.c.b16 %v664, %v662
        %v741 = vpack.c.b16 %v667, %v665
        %v742 = vpack.c.b16 %v668, %v666
        %v743 = vpack.c.b16 %v671, %v669
        %v744 = vpack.c.b16 %v672, %v670
        %v745 = vpack.c.b16 %v675, %v673
        %v746 = vpack.c.b16 %v676, %v674
        %v747 = vpack.c.b16 %v679, %v677
        %v748 = vpack.c.b16 %v680, %v678
        %v749 = vpack.c.b16 %v683, %v681
        %v750 = vpack.c.b16 %v684, %v682
        %v751 = vpack.c.b16 %v687, %v685
        %v752 = vpack.c.b16 %v688, %v686
        %817 = vmatpush.bf16.msra.mxu0 %v703
        %818 = vmatpush.bf16.msra.mxu0 %v701
        %819 = vmatpush.bf16.msra.mxu0 %v699
        %820 = vmatpush.bf16.msra.mxu0 %v697
        %821 = vmatpush.bf16.msra.mxu0 %v695
        %822 = vmatpush.bf16.msra.mxu0 %v693
        %823 = vmatpush.bf16.msra.mxu0 %v691
        %824 = vmatpush.bf16.msra.mxu0 %v689
        %825 = vmatmul.bf16.gmra.mxu0 %v428
        %v826 = vpop.f32.mrf.mxu0
        %v827 = vadd.f32 %v496, %v826
        %v828 = vpop.f32.mrf.mxu0
        %829 = vdwg.mxu0
        %830 = vmatpush.bf16.msra.mxu0 %v719
        %831 = vmatpush.bf16.msra.mxu0 %v717
        %832 = vmatpush.bf16.msra.mxu0 %v715
        %833 = vmatpush.bf16.msra.mxu0 %v713
        %834 = vmatpush.bf16.msra.mxu0 %v711
        %835 = vmatpush.bf16.msra.mxu0 %v709
        %836 = vmatpush.bf16.msra.mxu0 %v707
        %837 = vmatpush.bf16.msra.mxu0 %v705
        %838 = vmatmul.bf16.gmra.mxu0 %v429
        %v839 = vpop.f32.mrf.mxu0
        %v840 = vadd.f32 %v827, %v839
        %v841 = vpop.f32.mrf.mxu0
        %842 = vdwg.mxu0
        %843 = vmatpush.bf16.msra.mxu0 %v735
        %844 = vmatpush.bf16.msra.mxu0 %v733
        %845 = vmatpush.bf16.msra.mxu0 %v731
        %846 = vmatpush.bf16.msra.mxu0 %v729
        %847 = vmatpush.bf16.msra.mxu0 %v727
        %848 = vmatpush.bf16.msra.mxu0 %v725
        %849 = vmatpush.bf16.msra.mxu0 %v723
        %850 = vmatpush.bf16.msra.mxu0 %v721
        %851 = vmatmul.bf16.gmra.mxu0 %v430
        %v852 = vpop.f32.mrf.mxu0
        %v853 = vadd.f32 %v840, %v852
        %v854 = vpop.f32.mrf.mxu0
        %855 = vdwg.mxu0
        %856 = vmatpush.bf16.msra.mxu0 %v751
        %857 = vmatpush.bf16.msra.mxu0 %v749
        %858 = vmatpush.bf16.msra.mxu0 %v747
        %859 = vmatpush.bf16.msra.mxu0 %v745
        %860 = vmatpush.bf16.msra.mxu0 %v743
        %861 = vmatpush.bf16.msra.mxu0 %v741
        %862 = vmatpush.bf16.msra.mxu0 %v739
        %863 = vmatpush.bf16.msra.mxu0 %v737
        %864 = vmatmul.bf16.gmra.mxu0 %v431
        %v865 = vpop.f32.mrf.mxu0
        %v866 = vadd.f32 %v853, %v865
        %v867 = vpop.f32.mrf.mxu0
        %868 = vdwg.mxu0
        %869 = vmatpush.bf16.msra.mxu0 %v704
        %870 = vmatpush.bf16.msra.mxu0 %v702
        %871 = vmatpush.bf16.msra.mxu0 %v700
        %872 = vmatpush.bf16.msra.mxu0 %v698
        %873 = vmatpush.bf16.msra.mxu0 %v696
        %874 = vmatpush.bf16.msra.mxu0 %v694
        %875 = vmatpush.bf16.msra.mxu0 %v692
        %876 = vmatpush.bf16.msra.mxu0 %v690
        %877 = vmatmul.bf16.gmra.mxu0 %v428
        %v878 = vpop.f32.mrf.mxu0
        %v879 = vadd.f32 %v496, %v878
        %v880 = vpop.f32.mrf.mxu0
        %881 = vdwg.mxu0
        %882 = vmatpush.bf16.msra.mxu0 %v720
        %883 = vmatpush.bf16.msra.mxu0 %v718
        %884 = vmatpush.bf16.msra.mxu0 %v716
        %885 = vmatpush.bf16.msra.mxu0 %v714
        %886 = vmatpush.bf16.msra.mxu0 %v712
        %887 = vmatpush.bf16.msra.mxu0 %v710
        %888 = vmatpush.bf16.msra.mxu0 %v708
        %889 = vmatpush.bf16.msra.mxu0 %v706
        %890 = vmatmul.bf16.gmra.mxu0 %v429
        %v891 = vpop.f32.mrf.mxu0
        %v892 = vadd.f32 %v879, %v891
        %v893 = vpop.f32.mrf.mxu0
        %894 = vdwg.mxu0
        %895 = vmatpush.bf16.msra.mxu0 %v736
        %896 = vmatpush.bf16.msra.mxu0 %v734
        %897 = vmatpush.bf16.msra.mxu0 %v732
        %898 = vmatpush.bf16.msra.mxu0 %v730
        %899 = vmatpush.bf16.msra.mxu0 %v728
        %900 = vmatpush.bf16.msra.mxu0 %v726
        %901 = vmatpush.bf16.msra.mxu0 %v724
        %902 = vmatpush.bf16.msra.mxu0 %v722
        %903 = vmatmul.bf16.gmra.mxu0 %v430
        %v904 = vpop.f32.mrf.mxu0
        %v905 = vadd.f32 %v892, %v904
        %v906 = vpop.f32.mrf.mxu0
        %907 = vdwg.mxu0
        %908 = vmatpush.bf16.msra.mxu0 %v752
        %909 = vmatpush.bf16.msra.mxu0 %v750
        %910 = vmatpush.bf16.msra.mxu0 %v748
        %911 = vmatpush.bf16.msra.mxu0 %v746
        %912 = vmatpush.bf16.msra.mxu0 %v744
        %913 = vmatpush.bf16.msra.mxu0 %v742
        %914 = vmatpush.bf16.msra.mxu0 %v740
        %915 = vmatpush.bf16.msra.mxu0 %v738
        %916 = vmatmul.bf16.gmra.mxu0 %v431
        %v917 = vpop.f32.mrf.mxu0
        %v918 = vadd.f32 %v905, %v917
        %v919 = vpop.f32.mrf.mxu0
        %920 = vdwg.mxu0
        %v921 = vxor.u32 %v866, 2147483648
        %v922 = vxor.u32 %v918, 2147483648
        %v923 = vmul.f32 %v921, 1.442695
        %v924 = vpow.pop %v923
        %v925 = vmul.f32 %v922, 1.442695
        %v926 = vpow.pop %v925
        %v927 = vadd.f32 %v924, 1.0
        %v928 = vadd.f32 %v926, 1.0
        %v929 = vrcp.pop %v927
        %v930 = vmul.f32 %v927, %v929
        %v931 = vsub.f32 1.0, %v930
        %v932 = vmul.f32 %v929, %v931
        %v933 = vadd.f32 %v929, %v932
        %vm934 = vweird.f32 %v927
        %vm935 = vweird.f32 %v929
        %vm936 = vmor %vm934, %vm935
        %v937 = vsel %vm936, %v929, %v933
        %v938 = vand.u32 2147483647, %v927
        %vm939 = vcmp.eq.f32.partialorder %v938, 8.507059e+37
        %v940 = vand.u32 %v927, 2147483648
        %v941 = vor.u32 1.1754944e-38, %v940
        %v942 = vsel %vm939, %v941, %v937
        %v943 = vmul.f32 1.0, %v942
        %v944 = vrcp.pop %v928
        %v945 = vmul.f32 %v928, %v944
        %v946 = vsub.f32 1.0, %v945
        %v947 = vmul.f32 %v944, %v946
        %v948 = vadd.f32 %v944, %v947
        %vm949 = vweird.f32 %v928
        %vm950 = vweird.f32 %v944
        %vm951 = vmor %vm949, %vm950
        %v952 = vsel %vm951, %v944, %v948
        %v953 = vand.u32 2147483647, %v928
        %vm954 = vcmp.eq.f32.partialorder %v953, 8.507059e+37
        %v955 = vand.u32 %v928, 2147483648
        %v956 = vor.u32 1.1754944e-38, %v955
        %v957 = vsel %vm954, %v956, %v952
        %v958 = vmul.f32 1.0, %v957
        %v961 = vunpack.c.l.s4 839922192
        %v962 = vunpack.c.0.s8 %v961
        %v963 = vperm.slane %v386, %v962
        %v965 = vmul.f32 %v273, %v963
        %s966 = sld [smem:[#allocation7 + $0x3]]
        %968 = vst [vmem:[#allocation1] ss:$2 sm:$0xff] %v965
        %v969 = vld.sshfl [vmem:[#allocation1] sm:$0xff pattern:$0x75316420]
        %v970 = vld.sshfl [vmem:[#allocation1 + $0x8] sm:$0xff pattern:$0x75316420]
        %v973 = vsel %vm280, %v969, -inf
        %v974 = vrot.slane %v973, 4
        %v975 = vmax.f32 %v973, %v974
        %v976 = vrot.slane %v975, 2
        %v977 = vmax.f32 %v975, %v976
        %v978 = vrot.slane %v977, 1
        %v979 = vmax.f32 %v977, %v978
        %v980 = vsel %vm280, %v970, -inf
        %v981 = vrot.slane %v980, 4
        %v982 = vmax.f32 %v980, %v981
        %v983 = vrot.slane %v982, 2
        %v984 = vmax.f32 %v982, %v983
        %v985 = vrot.slane %v984, 1
        %v986 = vmax.f32 %v984, %v985
        %987 = vst [vmem:[#allocation1] ss:$2 sm:$0xff] %v965
        %v988 = vld.sshfl [vmem:[#allocation1] sm:$0xff pattern:$0x75316420]
        %v989 = vld.sshfl [vmem:[#allocation1 + $0x8] sm:$0xff pattern:$0x75316420]
        %v992 = vsel %vm280, %v988, 0.0
        %v993 = vrot.slane %v992, 4
        %v994 = vadd.f32 %v992, %v993
        %v995 = vrot.slane %v994, 2
        %v996 = vadd.f32 %v994, %v995
        %v997 = vrot.slane %v996, 1
        %v998 = vadd.f32 %v996, %v997
        %v999 = vsel %vm280, %v989, 0.0
        %v1000 = vrot.slane %v999, 4
        %v1001 = vadd.f32 %v999, %v1000
        %v1002 = vrot.slane %v1001, 2
        %v1003 = vadd.f32 %v1001, %v1002
        %v1004 = vrot.slane %v1003, 1
        %v1005 = vadd.f32 %v1003, %v1004
        %v1006 = vmul.f32 %v998, 0.25
        %v1007 = vmul.f32 %v1005, 0.25
        %v1008 = vpack.c.bf16 %v979, %v979
        %v1009 = vpack.c.bf16 %v986, %v986
        %v1010 = vpack.c.bf16 %v1006, %v1006
        %v1011 = vpack.c.bf16 %v1007, %v1007
        %v1012 = vld [vmem:[#allocation5] sm:$0xff]
        %v1013 = vld [vmem:[#allocation5 + $0x8] sm:$0xff]
        %v1014 = vld [vmem:[#allocation5 + $0x10] sm:$0xff]
        %v1015 = vld [vmem:[#allocation5 + $0x18] sm:$0xff]
        %v1016 = vld [vmem:[#allocation5 + $0x20] sm:$0xff]
        %v1017 = vld [vmem:[#allocation5 + $0x28] sm:$0xff]
        %v1018 = vld [vmem:[#allocation5 + $0x30] sm:$0xff]
        %v1019 = vld [vmem:[#allocation5 + $0x38] sm:$0xff]
        %v1020 = vld [vmem:[#allocation5 + $0x40] sm:$0xff]
        %v1021 = vld [vmem:[#allocation5 + $0x48] sm:$0xff]
        %v1022 = vld [vmem:[#allocation5 + $0x50] sm:$0xff]
        %v1023 = vld [vmem:[#allocation5 + $0x58] sm:$0xff]
        %v1024 = vld [vmem:[#allocation5 + $0x60] sm:$0xff]
        %v1025 = vld [vmem:[#allocation5 + $0x68] sm:$0xff]
        %v1026 = vld [vmem:[#allocation5 + $0x70] sm:$0xff]
        %v1027 = vld [vmem:[#allocation5 + $0x78] sm:$0xff]
        %v1028 = vld [vmem:[#allocation5 + $0x80] sm:$0xff]
        %v1029 = vld [vmem:[#allocation5 + $0x88] sm:$0xff]
        %v1030 = vld [vmem:[#allocation5 + $0x90] sm:$0xff]
        %v1031 = vld [vmem:[#allocation5 + $0x98] sm:$0xff]
        %v1032 = vld [vmem:[#allocation5 + $0xa0] sm:$0xff]
        %v1033 = vld [vmem:[#allocation5 + $0xa8] sm:$0xff]
        %v1034 = vld [vmem:[#allocation5 + $0xb0] sm:$0xff]
        %v1035 = vld [vmem:[#allocation5 + $0xb8] sm:$0xff]
        %v1036 = vld [vmem:[#allocation5 + $0xc0] sm:$0xff]
        %v1037 = vld [vmem:[#allocation5 + $0xc8] sm:$0xff]
        %v1038 = vld [vmem:[#allocation5 + $0xd0] sm:$0xff]
        %v1039 = vld [vmem:[#allocation5 + $0xd8] sm:$0xff]
        %v1040 = vld [vmem:[#allocation5 + $0xe0] sm:$0xff]
        %v1041 = vld [vmem:[#allocation5 + $0xe8] sm:$0xff]
        %v1042 = vld [vmem:[#allocation5 + $0xf0] sm:$0xff]
        %v1043 = vld [vmem:[#allocation5 + $0xf8] sm:$0xff]
        %v1044 = vld [vmem:[#allocation5 + $0x100] sm:$0xff]
        %v1045 = vld [vmem:[#allocation5 + $0x108] sm:$0xff]
        %v1046 = vld [vmem:[#allocation5 + $0x110] sm:$0xff]
        %v1047 = vld [vmem:[#allocation5 + $0x118] sm:$0xff]
        %v1048 = vld [vmem:[#allocation5 + $0x120] sm:$0xff]
        %v1049 = vld [vmem:[#allocation5 + $0x128] sm:$0xff]
        %v1050 = vld [vmem:[#allocation5 + $0x130] sm:$0xff]
        %v1051 = vld [vmem:[#allocation5 + $0x138] sm:$0xff]
        %v1052 = vld [vmem:[#allocation5 + $0x140] sm:$0xff]
        %v1053 = vld [vmem:[#allocation5 + $0x148] sm:$0xff]
        %v1054 = vld [vmem:[#allocation5 + $0x150] sm:$0xff]
        %v1055 = vld [vmem:[#allocation5 + $0x158] sm:$0xff]
        %v1056 = vld [vmem:[#allocation5 + $0x160] sm:$0xff]
        %v1057 = vld [vmem:[#allocation5 + $0x168] sm:$0xff]
        %v1058 = vld [vmem:[#allocation5 + $0x170] sm:$0xff]
        %v1059 = vld [vmem:[#allocation5 + $0x178] sm:$0xff]
        %v1060 = vld [vmem:[#allocation5 + $0x180] sm:$0xff]
        %v1061 = vld [vmem:[#allocation5 + $0x188] sm:$0xff]
        %v1062 = vld [vmem:[#allocation5 + $0x190] sm:$0xff]
        %v1063 = vld [vmem:[#allocation5 + $0x198] sm:$0xff]
        %v1064 = vld [vmem:[#allocation5 + $0x1a0] sm:$0xff]
        %v1065 = vld [vmem:[#allocation5 + $0x1a8] sm:$0xff]
        %v1066 = vld [vmem:[#allocation5 + $0x1b0] sm:$0xff]
        %v1067 = vld [vmem:[#allocation5 + $0x1b8] sm:$0xff]
        %v1068 = vld [vmem:[#allocation5 + $0x1c0] sm:$0xff]
        %v1069 = vld [vmem:[#allocation5 + $0x1c8] sm:$0xff]
        %v1070 = vld [vmem:[#allocation5 + $0x1d0] sm:$0xff]
        %v1071 = vld [vmem:[#allocation5 + $0x1d8] sm:$0xff]
        %v1072 = vld [vmem:[#allocation5 + $0x1e0] sm:$0xff]
        %v1073 = vld [vmem:[#allocation5 + $0x1e8] sm:$0xff]
        %v1074 = vld [vmem:[#allocation5 + $0x1f0] sm:$0xff]
        %v1075 = vld [vmem:[#allocation5 + $0x1f8] sm:$0xff]
        %v1076 = vstv %s966
        %v1141 = vunpack.c.l.b16 %v1012
        %v1142 = vunpack.c.h.b16 %v1012
        %v1143 = vunpack.c.l.b16 %v1013
        %v1144 = vunpack.c.h.b16 %v1013
        %v1145 = vunpack.c.l.b16 %v1014
        %v1146 = vunpack.c.h.b16 %v1014
        %v1147 = vunpack.c.l.b16 %v1015
        %v1148 = vunpack.c.h.b16 %v1015
        %v1149 = vunpack.c.l.b16 %v1016
        %v1150 = vunpack.c.h.b16 %v1016
        %v1151 = vunpack.c.l.b16 %v1017
        %v1152 = vunpack.c.h.b16 %v1017
        %v1153 = vunpack.c.l.b16 %v1018
        %v1154 = vunpack.c.h.b16 %v1018
        %v1155 = vunpack.c.l.b16 %v1019
        %v1156 = vunpack.c.h.b16 %v1019
        %v1157 = vunpack.c.l.b16 %v1020
        %v1158 = vunpack.c.h.b16 %v1020
        %v1159 = vunpack.c.l.b16 %v1021
        %v1160 = vunpack.c.h.b16 %v1021
        %v1161 = vunpack.c.l.b16 %v1022
        %v1162 = vunpack.c.h.b16 %v1022
        %v1163 = vunpack.c.l.b16 %v1023
        %v1164 = vunpack.c.h.b16 %v1023
        %v1165 = vunpack.c.l.b16 %v1024
        %v1166 = vunpack.c.h.b16 %v1024
        %v1167 = vunpack.c.l.b16 %v1025
        %v1168 = vunpack.c.h.b16 %v1025
        %v1169 = vunpack.c.l.b16 %v1026
        %v1170 = vunpack.c.h.b16 %v1026
        %v1171 = vunpack.c.l.b16 %v1027
        %v1172 = vunpack.c.h.b16 %v1027
        %v1173 = vunpack.c.l.b16 %v1028
        %v1174 = vunpack.c.h.b16 %v1028
        %v1175 = vunpack.c.l.b16 %v1029
        %v1176 = vunpack.c.h.b16 %v1029
        %v1177 = vunpack.c.l.b16 %v1030
        %v1178 = vunpack.c.h.b16 %v1030
        %v1179 = vunpack.c.l.b16 %v1031
        %v1180 = vunpack.c.h.b16 %v1031
        %v1181 = vunpack.c.l.b16 %v1032
        %v1182 = vunpack.c.h.b16 %v1032
        %v1183 = vunpack.c.l.b16 %v1033
        %v1184 = vunpack.c.h.b16 %v1033
        %v1185 = vunpack.c.l.b16 %v1034
        %v1186 = vunpack.c.h.b16 %v1034
        %v1187 = vunpack.c.l.b16 %v1035
        %v1188 = vunpack.c.h.b16 %v1035
        %v1189 = vunpack.c.l.b16 %v1036
        %v1190 = vunpack.c.h.b16 %v1036
        %v1191 = vunpack.c.l.b16 %v1037
        %v1192 = vunpack.c.h.b16 %v1037
        %v1193 = vunpack.c.l.b16 %v1038
        %v1194 = vunpack.c.h.b16 %v1038
        %v1195 = vunpack.c.l.b16 %v1039
        %v1196 = vunpack.c.h.b16 %v1039
        %v1197 = vunpack.c.l.b16 %v1040
        %v1198 = vunpack.c.h.b16 %v1040
        %v1199 = vunpack.c.l.b16 %v1041
        %v1200 = vunpack.c.h.b16 %v1041
        %v1201 = vunpack.c.l.b16 %v1042
        %v1202 = vunpack.c.h.b16 %v1042
        %v1203 = vunpack.c.l.b16 %v1043
        %v1204 = vunpack.c.h.b16 %v1043
        %v1205 = vunpack.c.l.b16 %v1044
        %v1206 = vunpack.c.h.b16 %v1044
        %v1207 = vunpack.c.l.b16 %v1045
        %v1208 = vunpack.c.h.b16 %v1045
        %v1209 = vunpack.c.l.b16 %v1046
        %v1210 = vunpack.c.h.b16 %v1046
        %v1211 = vunpack.c.l.b16 %v1047
        %v1212 = vunpack.c.h.b16 %v1047
        %v1213 = vunpack.c.l.b16 %v1048
        %v1214 = vunpack.c.h.b16 %v1048
        %v1215 = vunpack.c.l.b16 %v1049
        %v1216 = vunpack.c.h.b16 %v1049
        %v1217 = vunpack.c.l.b16 %v1050
        %v1218 = vunpack.c.h.b16 %v1050
        %v1219 = vunpack.c.l.b16 %v1051
        %v1220 = vunpack.c.h.b16 %v1051
        %v1221 = vunpack.c.l.b16 %v1052
        %v1222 = vunpack.c.h.b16 %v1052
        %v1223 = vunpack.c.l.b16 %v1053
        %v1224 = vunpack.c.h.b16 %v1053
        %v1225 = vunpack.c.l.b16 %v1054
        %v1226 = vunpack.c.h.b16 %v1054
        %v1227 = vunpack.c.l.b16 %v1055
        %v1228 = vunpack.c.h.b16 %v1055
        %v1229 = vunpack.c.l.b16 %v1056
        %v1230 = vunpack.c.h.b16 %v1056
        %v1231 = vunpack.c.l.b16 %v1057
        %v1232 = vunpack.c.h.b16 %v1057
        %v1233 = vunpack.c.l.b16 %v1058
        %v1234 = vunpack.c.h.b16 %v1058
        %v1235 = vunpack.c.l.b16 %v1059
        %v1236 = vunpack.c.h.b16 %v1059
        %v1237 = vunpack.c.l.b16 %v1060
        %v1238 = vunpack.c.h.b16 %v1060
        %v1239 = vunpack.c.l.b16 %v1061
        %v1240 = vunpack.c.h.b16 %v1061
        %v1241 = vunpack.c.l.b16 %v1062
        %v1242 = vunpack.c.h.b16 %v1062
        %v1243 = vunpack.c.l.b16 %v1063
        %v1244 = vunpack.c.h.b16 %v1063
        %v1245 = vunpack.c.l.b16 %v1064
        %v1246 = vunpack.c.h.b16 %v1064
        %v1247 = vunpack.c.l.b16 %v1065
        %v1248 = vunpack.c.h.b16 %v1065
        %v1249 = vunpack.c.l.b16 %v1066
        %v1250 = vunpack.c.h.b16 %v1066
        %v1251 = vunpack.c.l.b16 %v1067
        %v1252 = vunpack.c.h.b16 %v1067
        %v1253 = vunpack.c.l.b16 %v1068
        %v1254 = vunpack.c.h.b16 %v1068
        %v1255 = vunpack.c.l.b16 %v1069
        %v1256 = vunpack.c.h.b16 %v1069
        %v1257 = vunpack.c.l.b16 %v1070
        %v1258 = vunpack.c.h.b16 %v1070
        %v1259 = vunpack.c.l.b16 %v1071
        %v1260 = vunpack.c.h.b16 %v1071
        %v1261 = vunpack.c.l.b16 %v1072
        %v1262 = vunpack.c.h.b16 %v1072
        %v1263 = vunpack.c.l.b16 %v1073
        %v1264 = vunpack.c.h.b16 %v1073
        %v1265 = vunpack.c.l.b16 %v1074
        %v1266 = vunpack.c.h.b16 %v1074
        %v1267 = vunpack.c.l.b16 %v1075
        %v1268 = vunpack.c.h.b16 %v1075
        %v1269 = vpack.c.b16 %v1143, %v1141
        %v1270 = vpack.c.b16 %v1144, %v1142
        %v1271 = vpack.c.b16 %v1147, %v1145
        %v1272 = vpack.c.b16 %v1148, %v1146
        %v1273 = vpack.c.b16 %v1151, %v1149
        %v1274 = vpack.c.b16 %v1152, %v1150
        %v1275 = vpack.c.b16 %v1155, %v1153
        %v1276 = vpack.c.b16 %v1156, %v1154
        %v1277 = vpack.c.b16 %v1159, %v1157
        %v1278 = vpack.c.b16 %v1160, %v1158
        %v1279 = vpack.c.b16 %v1163, %v1161
        %v1280 = vpack.c.b16 %v1164, %v1162
        %v1281 = vpack.c.b16 %v1167, %v1165
        %v1282 = vpack.c.b16 %v1168, %v1166
        %v1283 = vpack.c.b16 %v1171, %v1169
        %v1284 = vpack.c.b16 %v1172, %v1170
        %v1285 = vpack.c.b16 %v1175, %v1173
        %v1286 = vpack.c.b16 %v1176, %v1174
        %v1287 = vpack.c.b16 %v1179, %v1177
        %v1288 = vpack.c.b16 %v1180, %v1178
        %v1289 = vpack.c.b16 %v1183, %v1181
        %v1290 = vpack.c.b16 %v1184, %v1182
        %v1291 = vpack.c.b16 %v1187, %v1185
        %v1292 = vpack.c.b16 %v1188, %v1186
        %v1293 = vpack.c.b16 %v1191, %v1189
        %v1294 = vpack.c.b16 %v1192, %v1190
        %v1295 = vpack.c.b16 %v1195, %v1193
        %v1296 = vpack.c.b16 %v1196, %v1194
        %v1297 = vpack.c.b16 %v1199, %v1197
        %v1298 = vpack.c.b16 %v1200, %v1198
        %v1299 = vpack.c.b16 %v1203, %v1201
        %v1300 = vpack.c.b16 %v1204, %v1202
        %v1301 = vpack.c.b16 %v1207, %v1205
        %v1302 = vpack.c.b16 %v1208, %v1206
        %v1303 = vpack.c.b16 %v1211, %v1209
        %v1304 = vpack.c.b16 %v1212, %v1210
        %v1305 = vpack.c.b16 %v1215, %v1213
        %v1306 = vpack.c.b16 %v1216, %v1214
        %v1307 = vpack.c.b16 %v1219, %v1217
        %v1308 = vpack.c.b16 %v1220, %v1218
        %v1309 = vpack.c.b16 %v1223, %v1221
        %v1310 = vpack.c.b16 %v1224, %v1222
        %v1311 = vpack.c.b16 %v1227, %v1225
        %v1312 = vpack.c.b16 %v1228, %v1226
        %v1313 = vpack.c.b16 %v1231, %v1229
        %v1314 = vpack.c.b16 %v1232, %v1230
        %v1315 = vpack.c.b16 %v1235, %v1233
        %v1316 = vpack.c.b16 %v1236, %v1234
        %v1317 = vpack.c.b16 %v1239, %v1237
        %v1318 = vpack.c.b16 %v1240, %v1238
        %v1319 = vpack.c.b16 %v1243, %v1241
        %v1320 = vpack.c.b16 %v1244, %v1242
        %v1321 = vpack.c.b16 %v1247, %v1245
        %v1322 = vpack.c.b16 %v1248, %v1246
        %v1323 = vpack.c.b16 %v1251, %v1249
        %v1324 = vpack.c.b16 %v1252, %v1250
        %v1325 = vpack.c.b16 %v1255, %v1253
        %v1326 = vpack.c.b16 %v1256, %v1254
        %v1327 = vpack.c.b16 %v1259, %v1257
        %v1328 = vpack.c.b16 %v1260, %v1258
        %v1329 = vpack.c.b16 %v1263, %v1261
        %v1330 = vpack.c.b16 %v1264, %v1262
        %v1331 = vpack.c.b16 %v1267, %v1265
        %v1332 = vpack.c.b16 %v1268, %v1266
        %1397 = vmatpush.bf16.msra.mxu0 %v1283
        %1398 = vmatpush.bf16.msra.mxu0 %v1281
        %1399 = vmatpush.bf16.msra.mxu0 %v1279
        %1400 = vmatpush.bf16.msra.mxu0 %v1277
        %1401 = vmatpush.bf16.msra.mxu0 %v1275
        %1402 = vmatpush.bf16.msra.mxu0 %v1273
        %1403 = vmatpush.bf16.msra.mxu0 %v1271
        %1404 = vmatpush.bf16.msra.mxu0 %v1269
        %1405 = vmatmul.bf16.gmra.mxu0 %v1008
        %v1406 = vpop.f32.mrf.mxu0
        %v1407 = vadd.f32 %v1076, %v1406
        %v1408 = vpop.f32.mrf.mxu0
        %1409 = vdwg.mxu0
        %1410 = vmatpush.bf16.msra.mxu0 %v1299
        %1411 = vmatpush.bf16.msra.mxu0 %v1297
        %1412 = vmatpush.bf16.msra.mxu0 %v1295
        %1413 = vmatpush.bf16.msra.mxu0 %v1293
        %1414 = vmatpush.bf16.msra.mxu0 %v1291
        %1415 = vmatpush.bf16.msra.mxu0 %v1289
        %1416 = vmatpush.bf16.msra.mxu0 %v1287
        %1417 = vmatpush.bf16.msra.mxu0 %v1285
        %1418 = vmatmul.bf16.gmra.mxu0 %v1009
        %v1419 = vpop.f32.mrf.mxu0
        %v1420 = vadd.f32 %v1407, %v1419
        %v1421 = vpop.f32.mrf.mxu0
        %1422 = vdwg.mxu0
        %1423 = vmatpush.bf16.msra.mxu0 %v1315
        %1424 = vmatpush.bf16.msra.mxu0 %v1313
        %1425 = vmatpush.bf16.msra.mxu0 %v1311
        %1426 = vmatpush.bf16.msra.mxu0 %v1309
        %1427 = vmatpush.bf16.msra.mxu0 %v1307
        %1428 = vmatpush.bf16.msra.mxu0 %v1305
        %1429 = vmatpush.bf16.msra.mxu0 %v1303
        %1430 = vmatpush.bf16.msra.mxu0 %v1301
        %1431 = vmatmul.bf16.gmra.mxu0 %v1010
        %v1432 = vpop.f32.mrf.mxu0
        %v1433 = vadd.f32 %v1420, %v1432
        %v1434 = vpop.f32.mrf.mxu0
        %1435 = vdwg.mxu0
        %1436 = vmatpush.bf16.msra.mxu0 %v1331
        %1437 = vmatpush.bf16.msra.mxu0 %v1329
        %1438 = vmatpush.bf16.msra.mxu0 %v1327
        %1439 = vmatpush.bf16.msra.mxu0 %v1325
        %1440 = vmatpush.bf16.msra.mxu0 %v1323
        %1441 = vmatpush.bf16.msra.mxu0 %v1321
        %1442 = vmatpush.bf16.msra.mxu0 %v1319
        %1443 = vmatpush.bf16.msra.mxu0 %v1317
        %1444 = vmatmul.bf16.gmra.mxu0 %v1011
        %v1445 = vpop.f32.mrf.mxu0
        %v1446 = vadd.f32 %v1433, %v1445
        %v1447 = vpop.f32.mrf.mxu0
        %1448 = vdwg.mxu0
        %1449 = vmatpush.bf16.msra.mxu0 %v1284
        %1450 = vmatpush.bf16.msra.mxu0 %v1282
        %1451 = vmatpush.bf16.msra.mxu0 %v1280
        %1452 = vmatpush.bf16.msra.mxu0 %v1278
        %1453 = vmatpush.bf16.msra.mxu0 %v1276
        %1454 = vmatpush.bf16.msra.mxu0 %v1274
        %1455 = vmatpush.bf16.msra.mxu0 %v1272
        %1456 = vmatpush.bf16.msra.mxu0 %v1270
        %1457 = vmatmul.bf16.gmra.mxu0 %v1008
        %v1458 = vpop.f32.mrf.mxu0
        %v1459 = vadd.f32 %v1076, %v1458
        %v1460 = vpop.f32.mrf.mxu0
        %1461 = vdwg.mxu0
        %1462 = vmatpush.bf16.msra.mxu0 %v1300
        %1463 = vmatpush.bf16.msra.mxu0 %v1298
        %1464 = vmatpush.bf16.msra.mxu0 %v1296
        %1465 = vmatpush.bf16.msra.mxu0 %v1294
        %1466 = vmatpush.bf16.msra.mxu0 %v1292
        %1467 = vmatpush.bf16.msra.mxu0 %v1290
        %1468 = vmatpush.bf16.msra.mxu0 %v1288
        %1469 = vmatpush.bf16.msra.mxu0 %v1286
        %1470 = vmatmul.bf16.gmra.mxu0 %v1009
        %v1471 = vpop.f32.mrf.mxu0
        %v1472 = vadd.f32 %v1459, %v1471
        %v1473 = vpop.f32.mrf.mxu0
        %1474 = vdwg.mxu0
        %1475 = vmatpush.bf16.msra.mxu0 %v1316
        %1476 = vmatpush.bf16.msra.mxu0 %v1314
        %1477 = vmatpush.bf16.msra.mxu0 %v1312
        %1478 = vmatpush.bf16.msra.mxu0 %v1310
        %1479 = vmatpush.bf16.msra.mxu0 %v1308
        %1480 = vmatpush.bf16.msra.mxu0 %v1306
        %1481 = vmatpush.bf16.msra.mxu0 %v1304
        %1482 = vmatpush.bf16.msra.mxu0 %v1302
        %1483 = vmatmul.bf16.gmra.mxu0 %v1010
        %v1484 = vpop.f32.mrf.mxu0
        %v1485 = vadd.f32 %v1472, %v1484
        %v1486 = vpop.f32.mrf.mxu0
        %1487 = vdwg.mxu0
        %1488 = vmatpush.bf16.msra.mxu0 %v1332
        %1489 = vmatpush.bf16.msra.mxu0 %v1330
        %1490 = vmatpush.bf16.msra.mxu0 %v1328
        %1491 = vmatpush.bf16.msra.mxu0 %v1326
        %1492 = vmatpush.bf16.msra.mxu0 %v1324
        %1493 = vmatpush.bf16.msra.mxu0 %v1322
        %1494 = vmatpush.bf16.msra.mxu0 %v1320
        %1495 = vmatpush.bf16.msra.mxu0 %v1318
        %1496 = vmatmul.bf16.gmra.mxu0 %v1011
        %v1497 = vpop.f32.mrf.mxu0
        %v1498 = vadd.f32 %v1485, %v1497
        %v1499 = vpop.f32.mrf.mxu0
        %1500 = vdwg.mxu0
        %v1501 = vxor.u32 %v1446, 2147483648
        %v1502 = vxor.u32 %v1498, 2147483648
        %v1503 = vmul.f32 %v1501, 1.442695
        %v1504 = vpow.pop %v1503
        %v1505 = vmul.f32 %v1502, 1.442695
        %v1506 = vpow.pop %v1505
        %v1507 = vadd.f32 %v1504, 1.0
        %v1508 = vadd.f32 %v1506, 1.0
        %v1509 = vrcp.pop %v1507
        %v1510 = vmul.f32 %v1507, %v1509
        %v1511 = vsub.f32 1.0, %v1510
        %v1512 = vmul.f32 %v1509, %v1511
        %v1513 = vadd.f32 %v1509, %v1512
        %vm1514 = vweird.f32 %v1507
        %vm1515 = vweird.f32 %v1509
        %vm1516 = vmor %vm1514, %vm1515
        %v1517 = vsel %vm1516, %v1509, %v1513
        %v1518 = vand.u32 2147483647, %v1507
        %vm1519 = vcmp.eq.f32.partialorder %v1518, 8.507059e+37
        %v1520 = vand.u32 %v1507, 2147483648
        %v1521 = vor.u32 1.1754944e-38, %v1520
        %v1522 = vsel %vm1519, %v1521, %v1517
        %v1523 = vmul.f32 1.0, %v1522
        %v1524 = vrcp.pop %v1508
        %v1525 = vmul.f32 %v1508, %v1524
        %v1526 = vsub.f32 1.0, %v1525
        %v1527 = vmul.f32 %v1524, %v1526
        %v1528 = vadd.f32 %v1524, %v1527
        %vm1529 = vweird.f32 %v1508
        %vm1530 = vweird.f32 %v1524
        %vm1531 = vmor %vm1529, %vm1530
        %v1532 = vsel %vm1531, %v1524, %v1528
        %v1533 = vand.u32 2147483647, %v1508
        %vm1534 = vcmp.eq.f32.partialorder %v1533, 8.507059e+37
        %v1535 = vand.u32 %v1508, 2147483648
        %v1536 = vor.u32 1.1754944e-38, %v1535
        %v1537 = vsel %vm1534, %v1536, %v1532
        %v1538 = vmul.f32 1.0, %v1537
        %v1539 = vperm.slane %v943, 0
        %v1540 = vperm.slane %v958, 0
        %v1541 = vadd.f32 %v357, %v1539
        %v1542 = vadd.f32 %v357, %v1540
        %v1545 = vrot.slane %v1542, 4
        %v1546 = vsel %vm280, %v1541, %v1545
        %v1548 = vmul.f32 %v273, %v1546
        %v1549 = vperm.slane %v1523, 0
        %v1550 = vperm.slane %v1538, 0
        %v1553 = vrot.slane %v1550, 4
        %v1554 = vsel %vm280, %v1549, %v1553
        %v1556 = vmul.f32 %v965, %v1554
        %v1557 = vadd.f32 %v1548, %v1556
        %1558 = vst [vmem:[%s272] sm:$0xff] %v1557
        %p1559 = scmp.lt.s32.totalorder %s19, 1
        %s1560 = scalar_select %p1559, %s19, 1
        %s1561 = smul.addr %s1560, 2
        %s1562 = smul.addr %s1561, 4
        %s1563 = scalar_lea.vmem %s5, %s1562
        // Predicated region
        $region53: #{k_attention_fwd.1} parent=39 // pred_check
          %p1564 = pneg %p147
        $region54: #{k_attention_fwd.1} parent=39 // pred_check_branch
          %1566 = sbr.rel (%p1564) target = $region56
        $region55: #{k_attention_fwd.1} parent=39 // pred_region
          _
        $region56: #{k_attention_fwd.1} parent=39 // pred_fallthru
          _
      $region40: #{k_attention_fwd.1} parent=5 // pred_fallthru
        _
      %p1567 = scmp.le.s32.totalorder 2, %s14
      // Predicated region
      $region57: #{k_attention_fwd.1} parent=5 // pred_check
        %p1568 = pneg %p1567
      $region58: #{k_attention_fwd.1} parent=5 // pred_check_branch
        %1570 = sbr.rel (%p1568) target = $region60
      $region59: #{k_attention_fwd.1} parent=5 // pred_region
        %s1571 = ssub.s32 %s14, 2
        // Predicated region
        $region61: #{k_attention_fwd.1} parent=59 // pred_check
          %p1572 = pneg %p153
        $region62: #{k_attention_fwd.1} parent=59 // pred_check_branch
          %1574 = sbr.rel (%p1572) target = $region64
        $region63: #{k_attention_fwd.1} parent=59 // pred_region
          %p1575 = scmp.lt.s32.totalorder %s20, 1
          %s1576 = scalar_select %p1575, %s20, 1
          %s1577 = smul.addr %s1576, 2
          %s1578 = smul.addr %s1577, 4
          %s1579 = scalar_lea.vmem %s5, %s1578
        $region64: #{k_attention_fwd.1} parent=59 // pred_fallthru
          _
      $region60: #{k_attention_fwd.1} parent=5 // pred_fallthru
        _
    $region6: #{k_attention_fwd.1} parent=1 // loop_footer
      %s18 = sadd.s32 1, %s14
    $region7: #{k_attention_fwd.1} parent=1 // loop_footer_branch
      %13 = sbr.rel target = $region3
    $region8: #{k_attention_fwd.1} parent=1 // loop_exit
      _
    %1580 = vsyncpa [#allocation3], 1
    %s1581 = scalar_lea.sflag [#allocation3], 1
    %1582 = vsyncpa %s1581, 1
    %1583 = vsyncpa [#allocation6], 1
    %1584 = vsyncpa [#allocation4], 1
    %s1585 = scalar_lea.sflag [#allocation4], 1
    %1586 = vsyncpa %s1585, 1

</llo_original>
